<compile_context>
chip_gen: v7x
topology: tpu7x:2x2x1
jax: 0.10.0
libtpu: 0.0.40
codegen_flags: <defaults>
</compile_context>

<pallas_src>
import functools

import jax
import jax.numpy as jnp
from jax.experimental import pallas as pl
from jax.experimental.pallas import tpu as pltpu


# ----------------------------- Pallas kernel --------------------------------
def _conv_taps(pad_ref, t_ref, b_ref, H):
    """3x3 'same' conv as 3 row-shifted matmuls against block-Toeplitz weights.

    pad_ref : VMEM scratch (H+2, W*C); rows 1..H hold activations, rows 0 and
              H+1 are zero (row halo).  Column boundaries are folded into T.
    t_ref   : (3, W*C, W*Cout) block-Toeplitz weights (one slab per ky tap)
    b_ref   : (1, W*Cout) bias tiled along W
    returns : (H, W*Cout) float32
    """
    acc = b_ref[...].astype(jnp.float32)                    # (1, N), broadcasts
    for dy in range(3):
        rows = pad_ref[pl.ds(dy, H), :]                      # (H, W*C), f32
        acc = acc + jnp.dot(rows, t_ref[dy].astype(jnp.float32),
                            preferred_element_type=jnp.float32)
    return acc


def _group_res_block_kernel(*refs, H, W, Cin, Cout, has_downsample):
    """Fully fused GroupResBlock forward for one batch element.

    Inputs (per grid step):
      g_ref  : (1, H, W*Cin)   input slab (NHWC flattened over W,C)
      t1,b1  : conv1 Toeplitz weights / tiled bias
      t2,b2  : conv2 Toeplitz weights / tiled bias
      td,bd  : optional downsample Toeplitz weights / tiled bias
    Output:
      o_ref  : (1, H, W*Cout)
    Scratch:
      xpad   : (H+2, W*Cin)   row-halo'd input buffer
      ypad   : (H+2, W*Cout)  row-halo'd relu(conv1 output) buffer
    """
    if has_downsample:
        (g_ref, t1_ref, b1_ref, t2_ref, b2_ref, td_ref, bd_ref,
         o_ref, xpad_ref, ypad_ref) = refs
    else:
        (g_ref, t1_ref, b1_ref, t2_ref, b2_ref,
         o_ref, xpad_ref, ypad_ref) = refs
        td_ref = bd_ref = None

    g = g_ref[0].astype(jnp.float32)                         # (H, W*Cin)

    # ---- stage 0: row halo only — zero the two boundary rows ----------------
    zrow_in = jnp.zeros((1, W * Cin), jnp.float32)
    xpad_ref[pl.ds(0, 1), :] = zrow_in
    xpad_ref[pl.ds(H + 1, 1), :] = zrow_in

    # ---- residual path (downsample conv on raw g, or identity) --------------
    if has_downsample:
        xpad_ref[pl.ds(1, H), :] = g
        res = _conv_taps(xpad_ref, td_ref, bd_ref, H)        # (H, W*Cout)
        # reuse the same buffer in place for conv1's input
        xpad_ref[pl.ds(1, H), :] = jnp.maximum(g, 0.0)
    else:
        res = g                                              # Cin == Cout: same layout
        xpad_ref[pl.ds(1, H), :] = jnp.maximum(g, 0.0)

    # ---- stage 1: out1 = conv1(relu(g)) --------------------------------------
    out1 = _conv_taps(xpad_ref, t1_ref, b1_ref, H)           # (H, W*Cout)

    # ---- stage 2: out2 = conv2(relu(out1)); intermediate never leaves VMEM ---
    zrow_out = jnp.zeros((1, W * Cout), jnp.float32)
    ypad_ref[pl.ds(0, 1), :] = zrow_out
    ypad_ref[pl.ds(H + 1, 1), :] = zrow_out
    ypad_ref[pl.ds(1, H), :] = jnp.maximum(out1, 0.0)
    out2 = _conv_taps(ypad_ref, t2_ref, b2_ref, H)

    # ---- stage 3: fused residual add, single lane-dense store ----------------
    o_ref[0] = (out2 + res).astype(o_ref.dtype)


# ----------------------- weight reshaping (wrapper side) ---------------------
def _block_toeplitz(w_hwio, width):
    """(3,3,Cin,Cout) HWIO conv weights -> (3, W*Cin, W*Cout).

    For ky tap dy:  out[h, w*Cout+co] += sum_{p,ci} x[h+dy-1, p*Cin+ci]
                                                  * T[dy, p*Cin+ci, w*Cout+co]
    with T[dy, p*Cin+ci, w*Cout+co] = w_hwio[dy, dx, ci, co] where p = w+dx-1,
    and zero for out-of-range columns (zero-padding folded into the weights).
    """
    kh, kw, cin, cout = w_hwio.shape
    p = jnp.arange(width)[:, None, None]           # input column index
    w = jnp.arange(width)[None, :, None]           # output column index
    d = jnp.arange(kw)[None, None, :]              # kx tap
    sel = (p == w + d - (kw // 2)).astype(w_hwio.dtype)      # (W, W, kw)
    t = jnp.einsum('pwd,ydio->ypiwo', sel, w_hwio)           # (kh, W, Cin, W, Cout)
    return t.reshape(kh, width * cin, width * cout)


def _tile_bias(b, width):
    return jnp.tile(b, width).reshape(1, width * b.shape[0])


# --------------------------- GroupResBlock wrapper ---------------------------
def init_group_res_block(key, in_dim, out_dim, dtype=jnp.float32):
    """Deterministic parameter init (PyTorch-like uniform(-1/sqrt(fan_in), ...))."""
    def conv_init(k, cin, cout):
        kw, kb = jax.random.split(k)
        fan_in = cin * 3 * 3
        bound = 1.0 / jnp.sqrt(fan_in)
        w_oihw = jax.random.uniform(kw, (cout, cin, 3, 3), dtype, -bound, bound)
        b = jax.random.uniform(kb, (cout,), dtype, -bound, bound)
        return w_oihw, b

    keys = jax.random.split(key, 3)
    params = {}
    params["w1_oihw"], params["b1"] = conv_init(keys[0], in_dim, out_dim)
    params["w2_oihw"], params["b2"] = conv_init(keys[1], out_dim, out_dim)
    if in_dim != out_dim:
        params["wd_oihw"], params["bd"] = conv_init(keys[2], in_dim, out_dim)
    return params


def group_res_block(g_nchw, params):
    """Fused Pallas GroupResBlock forward. Input/output are NCHW like PyTorch."""
    B, Cin, H, W = g_nchw.shape
    Cout = params["b1"].shape[0]
    has_downsample = "wd_oihw" in params

    def to_hwio(w_oihw):
        return jnp.transpose(w_oihw, (2, 3, 1, 0))  # OIHW -> HWIO

    t1 = _block_toeplitz(to_hwio(params["w1_oihw"]), W)
    t2 = _block_toeplitz(to_hwio(params["w2_oihw"]), W)
    b1 = _tile_bias(params["b1"], W)
    b2 = _tile_bias(params["b2"], W)

    # NCHW -> lane-packed (B, H, W*Cin) slab (layout plumbing only).
    g = jnp.transpose(g_nchw, (0, 2, 3, 1)).reshape(B, H, W * Cin)

    inputs = [g, t1, b1, t2, b2]
    in_specs = [
        pl.BlockSpec((1, H, W * Cin), lambda b: (b, 0, 0)),
        pl.BlockSpec((3, W * Cin, W * Cout), lambda b: (0, 0, 0)),
        pl.BlockSpec((1, W * Cout), lambda b: (0, 0)),
        pl.BlockSpec((3, W * Cout, W * Cout), lambda b: (0, 0, 0)),
        pl.BlockSpec((1, W * Cout), lambda b: (0, 0)),
    ]
    if has_downsample:
        td = _block_toeplitz(to_hwio(params["wd_oihw"]), W)
        bd = _tile_bias(params["bd"], W)
        inputs += [td, bd]
        in_specs += [
            pl.BlockSpec((3, W * Cin, W * Cout), lambda b: (0, 0, 0)),
            pl.BlockSpec((1, W * Cout), lambda b: (0, 0)),
        ]

    kernel = functools.partial(
        _group_res_block_kernel,
        H=H, W=W, Cin=Cin, Cout=Cout, has_downsample=has_downsample,
    )

    out_flat = pl.pallas_call(
        kernel,
        out_shape=jax.ShapeDtypeStruct((B, H, W * Cout), g_nchw.dtype),
        grid=(B,),
        in_specs=in_specs,
        out_specs=pl.BlockSpec((1, H, W * Cout), lambda b: (b, 0, 0)),
        scratch_shapes=[
            pltpu.VMEM((H + 2, W * Cin), jnp.float32),
            pltpu.VMEM((H + 2, W * Cout), jnp.float32),
        ],
        compiler_params=pltpu.CompilerParams(
            dimension_semantics=("parallel",)),
    )(*inputs)

    # (B, H, W*Cout) -> NCHW
    return jnp.transpose(out_flat.reshape(B, H, W, Cout), (0, 3, 1, 2))


# ------------------------------ reference (XLA) -------------------------------
def _conv_ref(x_nchw, w_oihw, b):
    y = jax.lax.conv_general_dilated(
        x_nchw, w_oihw, window_strides=(1, 1), padding=((1, 1), (1, 1)),
        dimension_numbers=("NCHW", "OIHW", "NCHW"),
        precision=jax.lax.Precision.HIGHEST)
    return y + b[None, :, None, None]


def group_res_block_ref(g_nchw, params):
    out = _conv_ref(jnp.maximum(g_nchw, 0.0), params["w1_oihw"], params["b1"])
    out = _conv_ref(jnp.maximum(out, 0.0), params["w2_oihw"], params["b2"])
    if "wd_oihw" in params:
        res = _conv_ref(g_nchw, params["wd_oihw"], params["bd"])
    else:
        res = g_nchw
    return out + res


# ----------------------------------- main ------------------------------------
if __name__ == "__main__":
    key = jax.random.PRNGKey(0)
    k_x, k_p, k_x2, k_p2 = jax.random.split(key, 4)

    fwd = jax.jit(group_res_block)

    # Case 1: in_dim != out_dim (downsample conv on the residual path).
    B, in_dim, out_dim, H, W = 2, 4, 8, 16, 16
    x = jax.random.normal(k_x, (B, in_dim, H, W), jnp.float32)
    params = init_group_res_block(k_p, in_dim, out_dim)

    out = jax.block_until_ready(fwd(x, params))
    ref = group_res_block_ref(x, params)
    assert out.shape == (B, out_dim, H, W), out.shape
    assert jnp.allclose(out, ref, atol=2e-3, rtol=2e-3), \
        float(jnp.max(jnp.abs(out - ref)))

    # Case 2: in_dim == out_dim (identity residual, fused inside the kernel).
    x2 = jax.random.normal(k_x2, (B, out_dim, H, W), jnp.float32)
    params2 = init_group_res_block(k_p2, out_dim, out_dim)

    out2 = jax.block_until_ready(fwd(x2, params2))
    ref2 = group_res_block_ref(x2, params2)
    assert out2.shape == (B, out_dim, H, W), out2.shape
    assert jnp.allclose(out2, ref2, atol=2e-3, rtol=2e-3), \
        float(jnp.max(jnp.abs(out2 - ref2)))

    print("KERNEL_OK")
</pallas_src>

<mosaic_0001>
module attributes {stable_mosaic.version = 11 : i64} {
  func.func @_group_res_block_kernel(%arg0: i32, %arg1: memref<1x16x64xf32, #tpu.memory_space<vmem>>, %arg2: memref<3x64x128xf32, #tpu.memory_space<vmem>>, %arg3: memref<1x128xf32, #tpu.memory_space<vmem>>, %arg4: memref<3x128x128xf32, #tpu.memory_space<vmem>>, %arg5: memref<1x128xf32, #tpu.memory_space<vmem>>, %arg6: memref<3x64x128xf32, #tpu.memory_space<vmem>>, %arg7: memref<1x128xf32, #tpu.memory_space<vmem>>, %arg8: memref<1x16x128xf32, #tpu.memory_space<vmem>>, %arg9: memref<18x64xf32, #tpu.memory_space<vmem>>, %arg10: memref<18x128xf32, #tpu.memory_space<vmem>>) attributes {dimension_semantics = [#tpu.dimension_semantics<parallel>], iteration_bounds = array<i64: 2>, scalar_prefetch = 0 : i64, scratch_operands = 2 : i64, tpu.core_type = #tpu.core_type<tc>, window_params = [{transform_indices = @transform_0, window_bounds = array<i64: 1, 16, 64>}, {pipeline_mode = #tpu.pipeline_mode<synchronous>, transform_indices = @transform_1, window_bounds = array<i64: 3, 64, 128>}, {pipeline_mode = #tpu.pipeline_mode<synchronous>, transform_indices = @transform_2, window_bounds = array<i64: 1, 128>}, {pipeline_mode = #tpu.pipeline_mode<synchronous>, transform_indices = @transform_3, window_bounds = array<i64: 3, 128, 128>}, {pipeline_mode = #tpu.pipeline_mode<synchronous>, transform_indices = @transform_4, window_bounds = array<i64: 1, 128>}, {pipeline_mode = #tpu.pipeline_mode<synchronous>, transform_indices = @transform_5, window_bounds = array<i64: 3, 64, 128>}, {pipeline_mode = #tpu.pipeline_mode<synchronous>, transform_indices = @transform_6, window_bounds = array<i64: 1, 128>}, {transform_indices = @transform_7, window_bounds = array<i64: 1, 16, 128>}]} {
    %c0 = arith.constant 0 : index
    %c0_0 = arith.constant 0 : index
    %c0_1 = arith.constant 0 : index
    %0 = vector.load %arg1[%c0, %c0_0, %c0_1] : memref<1x16x64xf32, #tpu.memory_space<vmem>>, vector<1x16x64xf32>
    %1 = vector.shape_cast %0 : vector<1x16x64xf32> to vector<16x64xf32>
    %cst = arith.constant 0.000000e+00 : f32
    %2 = vector.broadcast %cst : f32 to vector<1x64xf32>
    %c0_2 = arith.constant 0 : index
    %c0_3 = arith.constant 0 : index
    %3 = vector.load %arg9[%c0_2, %c0_3] : memref<18x64xf32, #tpu.memory_space<vmem>>, vector<1x64xf32>
    tpu.vector_store %arg9[%c0_2, %c0_3], %2 {strides = array<i32>} : memref<18x64xf32, #tpu.memory_space<vmem>>, vector<1x64xf32>,
    %c17 = arith.constant 17 : index
    %c0_4 = arith.constant 0 : index
    %4 = vector.load %arg9[%c17, %c0_4] : memref<18x64xf32, #tpu.memory_space<vmem>>, vector<1x64xf32>
    tpu.vector_store %arg9[%c17, %c0_4], %2 {strides = array<i32>} : memref<18x64xf32, #tpu.memory_space<vmem>>, vector<1x64xf32>,
    %c1 = arith.constant 1 : index
    %c0_5 = arith.constant 0 : index
    %5 = vector.load %arg9[%c1, %c0_5] : memref<18x64xf32, #tpu.memory_space<vmem>>, vector<16x64xf32>
    tpu.vector_store %arg9[%c1, %c0_5], %1 {strides = array<i32>} : memref<18x64xf32, #tpu.memory_space<vmem>>, vector<16x64xf32>,
    %c0_6 = arith.constant 0 : index
    %c0_7 = arith.constant 0 : index
    %6 = vector.load %arg7[%c0_6, %c0_7] : memref<1x128xf32, #tpu.memory_space<vmem>>, vector<1x128xf32>
    %c0_8 = arith.constant 0 : index
    %c0_9 = arith.constant 0 : index
    %7 = vector.load %arg9[%c0_8, %c0_9] : memref<18x64xf32, #tpu.memory_space<vmem>>, vector<16x64xf32>
    %c0_10 = arith.constant 0 : index
    %c0_11 = arith.constant 0 : index
    %c0_12 = arith.constant 0 : index
    %8 = vector.load %arg6[%c0_10, %c0_11, %c0_12] : memref<3x64x128xf32, #tpu.memory_space<vmem>>, vector<1x64x128xf32>
    %9 = vector.shape_cast %8 : vector<1x64x128xf32> to vector<64x128xf32>
    %cst_13 = arith.constant dense<0.000000e+00> : vector<16x128xf32>
    %10 = tpu.matmul %7, %9, %cst_13 {dimension_numbers = #tpu.dot_dimension_numbers<[1], [0], [0], [1], [0, 0, 1, 1], [], []>} : vector<16x64xf32>, vector<64x128xf32>, vector<16x128xf32> -> vector<16x128xf32>
    %11 = vector.broadcast %6 : vector<1x128xf32> to vector<16x128xf32>
    %12 = arith.addf %11, %10 : vector<16x128xf32>
    %c1_14 = arith.constant 1 : index
    %c0_15 = arith.constant 0 : index
    %13 = vector.load %arg9[%c1_14, %c0_15] : memref<18x64xf32, #tpu.memory_space<vmem>>, vector<16x64xf32>
    %c1_16 = arith.constant 1 : index
    %c0_17 = arith.constant 0 : index
    %c0_18 = arith.constant 0 : index
    %14 = vector.load %arg6[%c1_16, %c0_17, %c0_18] : memref<3x64x128xf32, #tpu.memory_space<vmem>>, vector<1x64x128xf32>
    %15 = vector.shape_cast %14 : vector<1x64x128xf32> to vector<64x128xf32>
    %cst_19 = arith.constant dense<0.000000e+00> : vector<16x128xf32>
    %16 = tpu.matmul %13, %15, %cst_19 {dimension_numbers = #tpu.dot_dimension_numbers<[1], [0], [0], [1], [0, 0, 1, 1], [], []>} : vector<16x64xf32>, vector<64x128xf32>, vector<16x128xf32> -> vector<16x128xf32>
    %17 = arith.addf %12, %16 : vector<16x128xf32>
    %c2 = arith.constant 2 : index
    %c0_20 = arith.constant 0 : index
    %18 = vector.load %arg9[%c2, %c0_20] : memref<18x64xf32, #tpu.memory_space<vmem>>, vector<16x64xf32>
    %c2_21 = arith.constant 2 : index
    %c0_22 = arith.constant 0 : index
    %c0_23 = arith.constant 0 : index
    %19 = vector.load %arg6[%c2_21, %c0_22, %c0_23] : memref<3x64x128xf32, #tpu.memory_space<vmem>>, vector<1x64x128xf32>
    %20 = vector.shape_cast %19 : vector<1x64x128xf32> to vector<64x128xf32>
    %cst_24 = arith.constant dense<0.000000e+00> : vector<16x128xf32>
    %21 = tpu.matmul %18, %20, %cst_24 {dimension_numbers = #tpu.dot_dimension_numbers<[1], [0], [0], [1], [0, 0, 1, 1], [], []>} : vector<16x64xf32>, vector<64x128xf32>, vector<16x128xf32> -> vector<16x128xf32>
    %22 = arith.addf %17, %21 : vector<16x128xf32>
    %cst_25 = arith.constant 0.000000e+00 : f32
    %23 = vector.broadcast %cst_25 : f32 to vector<16x64xf32>
    %24 = arith.maximumf %1, %23 : vector<16x64xf32>
    %c1_26 = arith.constant 1 : index
    %c0_27 = arith.constant 0 : index
    %25 = vector.load %arg9[%c1_26, %c0_27] : memref<18x64xf32, #tpu.memory_space<vmem>>, vector<16x64xf32>
    tpu.vector_store %arg9[%c1_26, %c0_27], %24 {strides = array<i32>} : memref<18x64xf32, #tpu.memory_space<vmem>>, vector<16x64xf32>,
    %c0_28 = arith.constant 0 : index
    %c0_29 = arith.constant 0 : index
    %26 = vector.load %arg3[%c0_28, %c0_29] : memref<1x128xf32, #tpu.memory_space<vmem>>, vector<1x128xf32>
    %c0_30 = arith.constant 0 : index
    %c0_31 = arith.constant 0 : index
    %27 = vector.load %arg9[%c0_30, %c0_31] : memref<18x64xf32, #tpu.memory_space<vmem>>, vector<16x64xf32>
    %c0_32 = arith.constant 0 : index
    %c0_33 = arith.constant 0 : index
    %c0_34 = arith.constant 0 : index
    %28 = vector.load %arg2[%c0_32, %c0_33, %c0_34] : memref<3x64x128xf32, #tpu.memory_space<vmem>>, vector<1x64x128xf32>
    %29 = vector.shape_cast %28 : vector<1x64x128xf32> to vector<64x128xf32>
    %cst_35 = arith.constant dense<0.000000e+00> : vector<16x128xf32>
    %30 = tpu.matmul %27, %29, %cst_35 {dimension_numbers = #tpu.dot_dimension_numbers<[1], [0], [0], [1], [0, 0, 1, 1], [], []>} : vector<16x64xf32>, vector<64x128xf32>, vector<16x128xf32> -> vector<16x128xf32>
    %31 = vector.broadcast %26 : vector<1x128xf32> to vector<16x128xf32>
    %32 = arith.addf %31, %30 : vector<16x128xf32>
    %c1_36 = arith.constant 1 : index
    %c0_37 = arith.constant 0 : index
    %33 = vector.load %arg9[%c1_36, %c0_37] : memref<18x64xf32, #tpu.memory_space<vmem>>, vector<16x64xf32>
    %c1_38 = arith.constant 1 : index
    %c0_39 = arith.constant 0 : index
    %c0_40 = arith.constant 0 : index
    %34 = vector.load %arg2[%c1_38, %c0_39, %c0_40] : memref<3x64x128xf32, #tpu.memory_space<vmem>>, vector<1x64x128xf32>
    %35 = vector.shape_cast %34 : vector<1x64x128xf32> to vector<64x128xf32>
    %cst_41 = arith.constant dense<0.000000e+00> : vector<16x128xf32>
    %36 = tpu.matmul %33, %35, %cst_41 {dimension_numbers = #tpu.dot_dimension_numbers<[1], [0], [0], [1], [0, 0, 1, 1], [], []>} : vector<16x64xf32>, vector<64x128xf32>, vector<16x128xf32> -> vector<16x128xf32>
    %37 = arith.addf %32, %36 : vector<16x128xf32>
    %c2_42 = arith.constant 2 : index
    %c0_43 = arith.constant 0 : index
    %38 = vector.load %arg9[%c2_42, %c0_43] : memref<18x64xf32, #tpu.memory_space<vmem>>, vector<16x64xf32>
    %c2_44 = arith.constant 2 : index
    %c0_45 = arith.constant 0 : index
    %c0_46 = arith.constant 0 : index
    %39 = vector.load %arg2[%c2_44, %c0_45, %c0_46] : memref<3x64x128xf32, #tpu.memory_space<vmem>>, vector<1x64x128xf32>
    %40 = vector.shape_cast %39 : vector<1x64x128xf32> to vector<64x128xf32>
    %cst_47 = arith.constant dense<0.000000e+00> : vector<16x128xf32>
    %41 = tpu.matmul %38, %40, %cst_47 {dimension_numbers = #tpu.dot_dimension_numbers<[1], [0], [0], [1], [0, 0, 1, 1], [], []>} : vector<16x64xf32>, vector<64x128xf32>, vector<16x128xf32> -> vector<16x128xf32>
    %42 = arith.addf %37, %41 : vector<16x128xf32>
    %cst_48 = arith.constant 0.000000e+00 : f32
    %43 = vector.broadcast %cst_48 : f32 to vector<1x128xf32>
    %c0_49 = arith.constant 0 : index
    %c0_50 = arith.constant 0 : index
    %44 = vector.load %arg10[%c0_49, %c0_50] : memref<18x128xf32, #tpu.memory_space<vmem>>, vector<1x128xf32>
    tpu.vector_store %arg10[%c0_49, %c0_50], %43 {strides = array<i32>} : memref<18x128xf32, #tpu.memory_space<vmem>>, vector<1x128xf32>,
    %c17_51 = arith.constant 17 : index
    %c0_52 = arith.constant 0 : index
    %45 = vector.load %arg10[%c17_51, %c0_52] : memref<18x128xf32, #tpu.memory_space<vmem>>, vector<1x128xf32>
    tpu.vector_store %arg10[%c17_51, %c0_52], %43 {strides = array<i32>} : memref<18x128xf32, #tpu.memory_space<vmem>>, vector<1x128xf32>,
    %cst_53 = arith.constant 0.000000e+00 : f32
    %46 = vector.broadcast %cst_53 : f32 to vector<16x128xf32>
    %47 = arith.maximumf %42, %46 : vector<16x128xf32>
    %c1_54 = arith.constant 1 : index
    %c0_55 = arith.constant 0 : index
    %48 = vector.load %arg10[%c1_54, %c0_55] : memref<18x128xf32, #tpu.memory_space<vmem>>, vector<16x128xf32>
    tpu.vector_store %arg10[%c1_54, %c0_55], %47 {strides = array<i32>} : memref<18x128xf32, #tpu.memory_space<vmem>>, vector<16x128xf32>,
    %c0_56 = arith.constant 0 : index
    %c0_57 = arith.constant 0 : index
    %49 = vector.load %arg5[%c0_56, %c0_57] : memref<1x128xf32, #tpu.memory_space<vmem>>, vector<1x128xf32>
    %c0_58 = arith.constant 0 : index
    %c0_59 = arith.constant 0 : index
    %50 = vector.load %arg10[%c0_58, %c0_59] : memref<18x128xf32, #tpu.memory_space<vmem>>, vector<16x128xf32>
    %c0_60 = arith.constant 0 : index
    %c0_61 = arith.constant 0 : index
    %c0_62 = arith.constant 0 : index
    %51 = vector.load %arg4[%c0_60, %c0_61, %c0_62] : memref<3x128x128xf32, #tpu.memory_space<vmem>>, vector<1x128x128xf32>
    %52 = vector.shape_cast %51 : vector<1x128x128xf32> to vector<128x128xf32>
    %cst_63 = arith.constant dense<0.000000e+00> : vector<16x128xf32>
    %53 = tpu.matmul %50, %52, %cst_63 {dimension_numbers = #tpu.dot_dimension_numbers<[1], [0], [0], [1], [0, 0, 1, 1], [], []>} : vector<16x128xf32>, vector<128x128xf32>, vector<16x128xf32> -> vector<16x128xf32>
    %54 = vector.broadcast %49 : vector<1x128xf32> to vector<16x128xf32>
    %55 = arith.addf %54, %53 : vector<16x128xf32>
    %c1_64 = arith.constant 1 : index
    %c0_65 = arith.constant 0 : index
    %56 = vector.load %arg10[%c1_64, %c0_65] : memref<18x128xf32, #tpu.memory_space<vmem>>, vector<16x128xf32>
    %c1_66 = arith.constant 1 : index
    %c0_67 = arith.constant 0 : index
    %c0_68 = arith.constant 0 : index
    %57 = vector.load %arg4[%c1_66, %c0_67, %c0_68] : memref<3x128x128xf32, #tpu.memory_space<vmem>>, vector<1x128x128xf32>
    %58 = vector.shape_cast %57 : vector<1x128x128xf32> to vector<128x128xf32>
    %cst_69 = arith.constant dense<0.000000e+00> : vector<16x128xf32>
    %59 = tpu.matmul %56, %58, %cst_69 {dimension_numbers = #tpu.dot_dimension_numbers<[1], [0], [0], [1], [0, 0, 1, 1], [], []>} : vector<16x128xf32>, vector<128x128xf32>, vector<16x128xf32> -> vector<16x128xf32>
    %60 = arith.addf %55, %59 : vector<16x128xf32>
    %c2_70 = arith.constant 2 : index
    %c0_71 = arith.constant 0 : index
    %61 = vector.load %arg10[%c2_70, %c0_71] : memref<18x128xf32, #tpu.memory_space<vmem>>, vector<16x128xf32>
    %c2_72 = arith.constant 2 : index
    %c0_73 = arith.constant 0 : index
    %c0_74 = arith.constant 0 : index
    %62 = vector.load %arg4[%c2_72, %c0_73, %c0_74] : memref<3x128x128xf32, #tpu.memory_space<vmem>>, vector<1x128x128xf32>
    %63 = vector.shape_cast %62 : vector<1x128x128xf32> to vector<128x128xf32>
    %cst_75 = arith.constant dense<0.000000e+00> : vector<16x128xf32>
    %64 = tpu.matmul %61, %63, %cst_75 {dimension_numbers = #tpu.dot_dimension_numbers<[1], [0], [0], [1], [0, 0, 1, 1], [], []>} : vector<16x128xf32>, vector<128x128xf32>, vector<16x128xf32> -> vector<16x128xf32>
    %65 = arith.addf %60, %64 : vector<16x128xf32>
    %66 = arith.addf %65, %22 : vector<16x128xf32>
    %c0_76 = arith.constant 0 : index
    %c0_77 = arith.constant 0 : index
    %c0_78 = arith.constant 0 : index
    %67 = vector.load %arg8[%c0_76, %c0_77, %c0_78] : memref<1x16x128xf32, #tpu.memory_space<vmem>>, vector<1x16x128xf32>
    %68 = vector.shape_cast %67 : vector<1x16x128xf32> to vector<16x128xf32>
    %69 = vector.shape_cast %66 : vector<16x128xf32> to vector<1x16x128xf32>
    tpu.vector_store %arg8[%c0_76, %c0_77, %c0_78], %69 {strides = array<i32>} : memref<1x16x128xf32, #tpu.memory_space<vmem>>, vector<1x16x128xf32>,
    return
  }
  func.func @transform_0(%arg0: i32) -> (i32, i32, i32) {
    %c0_i32 = arith.constant 0 : i32
    %c0_i32_0 = arith.constant 0 : i32
    %c0_i32_1 = arith.constant 0 : i32
    return %arg0, %c0_i32, %c0_i32_0 : i32, i32, i32
  }
  func.func @transform_1(%arg0: i32) -> (i32, i32, i32) {
    %c0_i32 = arith.constant 0 : i32
    %c0_i32_0 = arith.constant 0 : i32
    %c0_i32_1 = arith.constant 0 : i32
    %c0_i32_2 = arith.constant 0 : i32
    return %c0_i32, %c0_i32_0, %c0_i32_1 : i32, i32, i32
  }
  func.func @transform_2(%arg0: i32) -> (i32, i32) {
    %c0_i32 = arith.constant 0 : i32
    %c0_i32_0 = arith.constant 0 : i32
    %c0_i32_1 = arith.constant 0 : i32
    return %c0_i32, %c0_i32_0 : i32, i32
  }
  func.func @transform_3(%arg0: i32) -> (i32, i32, i32) {
    %c0_i32 = arith.constant 0 : i32
    %c0_i32_0 = arith.constant 0 : i32
    %c0_i32_1 = arith.constant 0 : i32
    %c0_i32_2 = arith.constant 0 : i32
    return %c0_i32, %c0_i32_0, %c0_i32_1 : i32, i32, i32
  }
  func.func @transform_4(%arg0: i32) -> (i32, i32) {
    %c0_i32 = arith.constant 0 : i32
    %c0_i32_0 = arith.constant 0 : i32
    %c0_i32_1 = arith.constant 0 : i32
    return %c0_i32, %c0_i32_0 : i32, i32
  }
  func.func @transform_5(%arg0: i32) -> (i32, i32, i32) {
    %c0_i32 = arith.constant 0 : i32
    %c0_i32_0 = arith.constant 0 : i32
    %c0_i32_1 = arith.constant 0 : i32
    %c0_i32_2 = arith.constant 0 : i32
    return %c0_i32, %c0_i32_0, %c0_i32_1 : i32, i32, i32
  }
  func.func @transform_6(%arg0: i32) -> (i32, i32) {
    %c0_i32 = arith.constant 0 : i32
    %c0_i32_0 = arith.constant 0 : i32
    %c0_i32_1 = arith.constant 0 : i32
    return %c0_i32, %c0_i32_0 : i32, i32
  }
  func.func @transform_7(%arg0: i32) -> (i32, i32, i32) {
    %c0_i32 = arith.constant 0 : i32
    %c0_i32_0 = arith.constant 0 : i32
    %c0_i32_1 = arith.constant 0 : i32
    return %arg0, %c0_i32, %c0_i32_0 : i32, i32, i32
  }
}

</mosaic_0001>

<llo_original>
// kernel: tile.18
$region0: #{tile.18}
  #allocation0 [shape = 's32[1]{0}', space=sflag, size = 0x4, scoped, tag = 'scoped memory for tile.18']
  %s0 = inlined_call_operand.vmem [shape: f32[8], index: 0, kind: input, shape index: {}]
  %s1 = inlined_call_operand.vmem [shape: f32[16,8], index: 1, kind: output, shape index: {}]
  // Predicated region
  $region2: #{tile.18} parent=0 // pred_check
    _
  $region3: #{tile.18} parent=0 // pred_check_branch
    %3 = sbr.rel (0) target = $region5
  $region4: #{tile.18} parent=0 // pred_region
    _
  $region5: #{tile.18} parent=0 // pred_fallthru
    _
  %v4 = vld [vmem:[%s0] ss:$0 sm:$0xff]
  %5 = vst [vmem:[%s1] sm:$0xff] %v4
  %s6 = scalar_lea.vmem %s1, 8
  %7 = vst [vmem:[%s6] sm:$0xff] %v4

// kernel: tile.19
$region0: #{tile.19}
  %s0 = inlined_call_operand.vmem [shape: f32[16,8], index: 0, kind: input, shape index: {}]
  %s1 = inlined_call_operand.vmem [shape: f32[1,128], index: 1, kind: output, shape index: {}]
  $region1: #{tile.19} parent=0
    #allocation0 [shape = 'u8[4096]{0}', space=vmem, size = 0x1000, scoped, tag = 'scoped mem for output reshape']
    %v2 = vld [vmem:[%s0] sm:$0x1]
    %vm3 = vcmask 64512
    %4 = vst.msk [vmem:[#allocation0] sm:$0x1] %vm3, %v2
    %s5 = scalar_lea.vmem %s0, 15
    %v6 = vld [vmem:[%s5] sm:$0x1]
    %7 = vrot.lane.b32.xlu0 %v6, 120
    %v8 = vpop.permute.xlu0 %7
    %vm9 = vcmask 1048512
    %10 = vst.msk [vmem:[#allocation0] sm:$0x1] %vm9, %v8
    %s11 = scalar_lea.vmem %s0, 14
    %v12 = vld [vmem:[%s11] sm:$0x1]
    %13 = vrot.lane.b32.xlu0 %v12, 112
    %v14 = vpop.permute.xlu0 %13
    %vm15 = vcmask 982912
    %16 = vst.msk [vmem:[#allocation0] sm:$0x1] %vm15, %v14
    %s17 = scalar_lea.vmem %s0, 13
    %v18 = vld [vmem:[%s17] sm:$0x1]
    %19 = vrot.lane.b32.xlu0 %v18, 104
    %v20 = vpop.permute.xlu0 %19
    %vm21 = vcmask 917312
    %22 = vst.msk [vmem:[#allocation0] sm:$0x1] %vm21, %v20
    %s23 = scalar_lea.vmem %s0, 12
    %v24 = vld [vmem:[%s23] sm:$0x1]
    %25 = vrot.lane.b32.xlu0 %v24, 96
    %v26 = vpop.permute.xlu0 %25
    %vm27 = vcmask 851712
    %28 = vst.msk [vmem:[#allocation0] sm:$0x1] %vm27, %v26
    %s29 = scalar_lea.vmem %s0, 11
    %v30 = vld [vmem:[%s29] sm:$0x1]
    %31 = vrot.lane.b32.xlu0 %v30, 88
    %v32 = vpop.permute.xlu0 %31
    %vm33 = vcmask 786112
    %34 = vst.msk [vmem:[#allocation0] sm:$0x1] %vm33, %v32
    %s35 = scalar_lea.vmem %s0, 10
    %v36 = vld [vmem:[%s35] sm:$0x1]
    %37 = vrot.lane.b32.xlu0 %v36, 80
    %v38 = vpop.permute.xlu0 %37
    %vm39 = vcmask 720512
    %40 = vst.msk [vmem:[#allocation0] sm:$0x1] %vm39, %v38
    %s41 = scalar_lea.vmem %s0, 9
    %v42 = vld [vmem:[%s41] sm:$0x1]
    %43 = vrot.lane.b32.xlu0 %v42, 72
    %v44 = vpop.permute.xlu0 %43
    %vm45 = vcmask 654912
    %46 = vst.msk [vmem:[#allocation0] sm:$0x1] %vm45, %v44
    %s47 = scalar_lea.vmem %s0, 8
    %v48 = vld [vmem:[%s47] sm:$0x1]
    %49 = vrot.lane.b32.xlu0 %v48, 64
    %v50 = vpop.permute.xlu0 %49
    %vm51 = vcmask 589312
    %52 = vst.msk [vmem:[#allocation0] sm:$0x1] %vm51, %v50
    %s53 = scalar_lea.vmem %s0, 7
    %v54 = vld [vmem:[%s53] sm:$0x1]
    %55 = vrot.lane.b32.xlu0 %v54, 56
    %v56 = vpop.permute.xlu0 %55
    %vm57 = vcmask 523712
    %58 = vst.msk [vmem:[#allocation0] sm:$0x1] %vm57, %v56
    %s59 = scalar_lea.vmem %s0, 6
    %v60 = vld [vmem:[%s59] sm:$0x1]
    %61 = vrot.lane.b32.xlu0 %v60, 48
    %v62 = vpop.permute.xlu0 %61
    %vm63 = vcmask 458112
    %64 = vst.msk [vmem:[#allocation0] sm:$0x1] %vm63, %v62
    %s65 = scalar_lea.vmem %s0, 5
    %v66 = vld [vmem:[%s65] sm:$0x1]
    %67 = vrot.lane.b32.xlu0 %v66, 40
    %v68 = vpop.permute.xlu0 %67
    %vm69 = vcmask 392512
    %70 = vst.msk [vmem:[#allocation0] sm:$0x1] %vm69, %v68
    %s71 = scalar_lea.vmem %s0, 4
    %v72 = vld [vmem:[%s71] sm:$0x1]
    %73 = vrot.lane.b32.xlu0 %v72, 32
    %v74 = vpop.permute.xlu0 %73
    %vm75 = vcmask 326912
    %76 = vst.msk [vmem:[#allocation0] sm:$0x1] %vm75, %v74
    %s77 = scalar_lea.vmem %s0, 3
    %v78 = vld [vmem:[%s77] sm:$0x1]
    %79 = vrot.lane.b32.xlu0 %v78, 24
    %v80 = vpop.permute.xlu0 %79
    %vm81 = vcmask 261312
    %82 = vst.msk [vmem:[#allocation0] sm:$0x1] %vm81, %v80
    %s83 = scalar_lea.vmem %s0, 2
    %v84 = vld [vmem:[%s83] sm:$0x1]
    %85 = vrot.lane.b32.xlu0 %v84, 16
    %v86 = vpop.permute.xlu0 %85
    %vm87 = vcmask 195712
    %88 = vst.msk [vmem:[#allocation0] sm:$0x1] %vm87, %v86
    %s89 = scalar_lea.vmem %s0, 1
    %v90 = vld [vmem:[%s89] sm:$0x1]
    %91 = vrot.lane.b32.xlu0 %v90, 8
    %v92 = vpop.permute.xlu0 %91
    %vm93 = vcmask 130112
    %94 = vst.msk [vmem:[#allocation0] sm:$0x1] %vm93, %v92
    %s96 = sshllo.u32 0, 1
    %v98 = vld [vmem:[#allocation0] sm:%s96]
    %s99 = sshllo.u32 0, 1
    %100 = vst [vmem:[%s1] sm:%s99] %v98

// kernel: group_res_block.1
$region0: #{group_res_block.1}
  #allocation0 [shape = 'u32[]', space=smem, size = 0x4, offset = 0x4, fixed_abs, tag = 'smem constant byte address 0x4 - core index']
  #allocation1 [shape = 'u32[144,128]{1,0:T(1,128)}', space=vmem, size = 0x12000, scoped, tag = 'internal scratch']
  #allocation2 [shape = 'f32[18,64]{1,0:T(8,128)}', space=vmem, size = 0x3000, scoped, tag = 'scratch operand']
  #allocation3 [shape = 'f32[18,128]{1,0:T(8,128)}', space=vmem, size = 0x3000, scoped, tag = 'scratch operand']
  %s0 = inlined_call_operand.vmem [shape: f32[2,16,64], index: 0, kind: input, shape index: {}]
  %s1 = inlined_call_operand.vmem [shape: f32[3,64,128], index: 1, kind: input, shape index: {}]
  %s2 = inlined_call_operand.vmem [shape: f32[1,128], index: 2, kind: input, shape index: {}]
  %s3 = inlined_call_operand.vmem [shape: f32[3,128,128], index: 3, kind: input, shape index: {}]
  %s4 = inlined_call_operand.vmem [shape: f32[1,128], index: 4, kind: input, shape index: {}]
  %s5 = inlined_call_operand.vmem [shape: f32[3,64,128], index: 5, kind: input, shape index: {}]
  %s6 = inlined_call_operand.vmem [shape: f32[1,128], index: 6, kind: input, shape index: {}]
  %s7 = inlined_call_operand.vmem [shape: f32[2,16,128], index: 7, kind: output, shape index: {}]
  %s8 = sld [smem:[#allocation0]]
  $region61: #{group_res_block.1} parent=0
    _
  %s10 = ssub.s32 1, %s8
  %s11 = scalar_select 0, %s10, %s8
  loop: start=0, step=1, limit=4
  $region2: #{group_res_block.1} parent=0 // loop_pre_header
    _
  $region3: #{group_res_block.1} parent=0 // loop_header
    %s13 = sphi 0, %s17
    %p14 = scmp.ge.s32.totalorder %s13, 4
    %s23 = sphi 0, %s25
    %s26 = sphi 0, %s23
    %s27 = sphi 0, %s26
    %s43 = sphi 0, %s27
    %s47 = sphi 0, %s47
    %s49 = sphi 0, %s47
    %s50 = sphi 0, %s49
    %s64 = sphi 0, %s50
    %s68 = sphi 0, %s68
    %s70 = sphi 0, %s68
    %s71 = sphi 0, %s70
    %s85 = sphi 0, %s71
    %s89 = sphi 0, %s89
    %s91 = sphi 0, %s89
    %s92 = sphi 0, %s91
    %s106 = sphi 0, %s92
    %s110 = sphi 0, %s110
    %s112 = sphi 0, %s110
    %s113 = sphi 0, %s112
    %s127 = sphi 0, %s113
    %s131 = sphi 0, %s131
    %s133 = sphi 0, %s131
    %s134 = sphi 0, %s133
    %s148 = sphi 0, %s134
    %s152 = sphi 0, %s152
    %s154 = sphi 0, %s152
    %s155 = sphi 0, %s154
    %s169 = sphi 0, %s155
    %s175 = sphi 0, %s177
    %s178 = sphi 0, %s175
    %s179 = sphi 0, %s178
    %s195 = sphi 0, %s179
  $region4: #{group_res_block.1} parent=0 // loop_header_branch
    %16 = sbr.rel (%p14) target = $region8
  $region5: #{group_res_block.1} parent=0 // loop_body
    %s18 = ssub.s32 %s13, 1
    %s19 = ssub.s32 %s13, 2
    %s20 = sadd.s32 %s13, 1
    %s21 = ssub.s32 %s13, %s20
    %p22 = scmp.eq.s32.totalorder %s21, 0
    %s24 = sadd.s32 %s23, 1
    %s25 = scalar_select %p22, %s23, %s24
    %p28 = pneg %p22
    %p29 = scmp.eq.s32.totalorder %s13, 1
    %p30 = por %p28, %p29
    %p31 = scmp.ne.s32.totalorder %s23, %s26
    %p32 = scmp.eq.s32.totalorder %s13, 0
    %p33 = por %p31, %p32
    %p34 = scmp.ne.s32.totalorder %s23, %s26
    %p35 = scmp.eq.s32.totalorder %s18, 1
    %p36 = por %p34, %p35
    %p37 = scmp.ne.s32.totalorder %s26, %s27
    %p38 = scmp.eq.s32.totalorder %s18, 0
    %p39 = por %p37, %p38
    %p40 = scmp.ne.s32.totalorder %s26, %s27
    %p41 = scmp.eq.s32.totalorder %s19, 1
    %p42 = por %p40, %p41
    %p44 = scmp.ne.s32.totalorder %s27, %s43
    %p45 = scmp.eq.s32.totalorder %s19, 0
    %p46 = por %p44, %p45
    %s48 = sadd.s32 %s47, 1
    %p51 = scmp.eq.s32.totalorder %s13, 1
    %p52 = scmp.ne.s32.totalorder %s47, %s49
    %p53 = scmp.eq.s32.totalorder %s13, 0
    %p54 = por %p52, %p53
    %p55 = scmp.ne.s32.totalorder %s47, %s49
    %p56 = scmp.eq.s32.totalorder %s18, 1
    %p57 = por %p55, %p56
    %p58 = scmp.ne.s32.totalorder %s49, %s50
    %p59 = scmp.eq.s32.totalorder %s18, 0
    %p60 = por %p58, %p59
    %p61 = scmp.ne.s32.totalorder %s49, %s50
    %p62 = scmp.eq.s32.totalorder %s19, 1
    %p63 = por %p61, %p62
    %p65 = scmp.ne.s32.totalorder %s50, %s64
    %p66 = scmp.eq.s32.totalorder %s19, 0
    %p67 = por %p65, %p66
    %s69 = sadd.s32 %s68, 1
    %p72 = scmp.eq.s32.totalorder %s13, 1
    %p73 = scmp.ne.s32.totalorder %s68, %s70
    %p74 = scmp.eq.s32.totalorder %s13, 0
    %p75 = por %p73, %p74
    %p76 = scmp.ne.s32.totalorder %s68, %s70
    %p77 = scmp.eq.s32.totalorder %s18, 1
    %p78 = por %p76, %p77
    %p79 = scmp.ne.s32.totalorder %s70, %s71
    %p80 = scmp.eq.s32.totalorder %s18, 0
    %p81 = por %p79, %p80
    %p82 = scmp.ne.s32.totalorder %s70, %s71
    %p83 = scmp.eq.s32.totalorder %s19, 1
    %p84 = por %p82, %p83
    %p86 = scmp.ne.s32.totalorder %s71, %s85
    %p87 = scmp.eq.s32.totalorder %s19, 0
    %p88 = por %p86, %p87
    %s90 = sadd.s32 %s89, 1
    %p93 = scmp.eq.s32.totalorder %s13, 1
    %p94 = scmp.ne.s32.totalorder %s89, %s91
    %p95 = scmp.eq.s32.totalorder %s13, 0
    %p96 = por %p94, %p95
    %p97 = scmp.ne.s32.totalorder %s89, %s91
    %p98 = scmp.eq.s32.totalorder %s18, 1
    %p99 = por %p97, %p98
    %p100 = scmp.ne.s32.totalorder %s91, %s92
    %p101 = scmp.eq.s32.totalorder %s18, 0
    %p102 = por %p100, %p101
    %p103 = scmp.ne.s32.totalorder %s91, %s92
    %p104 = scmp.eq.s32.totalorder %s19, 1
    %p105 = por %p103, %p104
    %p107 = scmp.ne.s32.totalorder %s92, %s106
    %p108 = scmp.eq.s32.totalorder %s19, 0
    %p109 = por %p107, %p108
    %s111 = sadd.s32 %s110, 1
    %p114 = scmp.eq.s32.totalorder %s13, 1
    %p115 = scmp.ne.s32.totalorder %s110, %s112
    %p116 = scmp.eq.s32.totalorder %s13, 0
    %p117 = por %p115, %p116
    %p118 = scmp.ne.s32.totalorder %s110, %s112
    %p119 = scmp.eq.s32.totalorder %s18, 1
    %p120 = por %p118, %p119
    %p121 = scmp.ne.s32.totalorder %s112, %s113
    %p122 = scmp.eq.s32.totalorder %s18, 0
    %p123 = por %p121, %p122
    %p124 = scmp.ne.s32.totalorder %s112, %s113
    %p125 = scmp.eq.s32.totalorder %s19, 1
    %p126 = por %p124, %p125
    %p128 = scmp.ne.s32.totalorder %s113, %s127
    %p129 = scmp.eq.s32.totalorder %s19, 0
    %p130 = por %p128, %p129
    %s132 = sadd.s32 %s131, 1
    %p135 = scmp.eq.s32.totalorder %s13, 1
    %p136 = scmp.ne.s32.totalorder %s131, %s133
    %p137 = scmp.eq.s32.totalorder %s13, 0
    %p138 = por %p136, %p137
    %p139 = scmp.ne.s32.totalorder %s131, %s133
    %p140 = scmp.eq.s32.totalorder %s18, 1
    %p141 = por %p139, %p140
    %p142 = scmp.ne.s32.totalorder %s133, %s134
    %p143 = scmp.eq.s32.totalorder %s18, 0
    %p144 = por %p142, %p143
    %p145 = scmp.ne.s32.totalorder %s133, %s134
    %p146 = scmp.eq.s32.totalorder %s19, 1
    %p147 = por %p145, %p146
    %p149 = scmp.ne.s32.totalorder %s134, %s148
    %p150 = scmp.eq.s32.totalorder %s19, 0
    %p151 = por %p149, %p150
    %s153 = sadd.s32 %s152, 1
    %p156 = scmp.eq.s32.totalorder %s13, 1
    %p157 = scmp.ne.s32.totalorder %s152, %s154
    %p158 = scmp.eq.s32.totalorder %s13, 0
    %p159 = por %p157, %p158
    %p160 = scmp.ne.s32.totalorder %s152, %s154
    %p161 = scmp.eq.s32.totalorder %s18, 1
    %p162 = por %p160, %p161
    %p163 = scmp.ne.s32.totalorder %s154, %s155
    %p164 = scmp.eq.s32.totalorder %s18, 0
    %p165 = por %p163, %p164
    %p166 = scmp.ne.s32.totalorder %s154, %s155
    %p167 = scmp.eq.s32.totalorder %s19, 1
    %p168 = por %p166, %p167
    %p170 = scmp.ne.s32.totalorder %s155, %s169
    %p171 = scmp.eq.s32.totalorder %s19, 0
    %p172 = por %p170, %p171
    %s173 = ssub.s32 %s13, %s20
    %p174 = scmp.eq.s32.totalorder %s173, 0
    %s176 = sadd.s32 %s175, 1
    %s177 = scalar_select %p174, %s175, %s176
    %p180 = pneg %p174
    %p181 = scmp.eq.s32.totalorder %s13, 1
    %p182 = por %p180, %p181
    %p183 = scmp.ne.s32.totalorder %s175, %s178
    %p184 = scmp.eq.s32.totalorder %s13, 0
    %p185 = por %p183, %p184
    %p186 = scmp.ne.s32.totalorder %s175, %s178
    %p187 = scmp.eq.s32.totalorder %s18, 1
    %p188 = por %p186, %p187
    %p189 = scmp.ne.s32.totalorder %s178, %s179
    %p190 = scmp.eq.s32.totalorder %s18, 0
    %p191 = por %p189, %p190
    %p192 = scmp.ne.s32.totalorder %s178, %s179
    %p193 = scmp.eq.s32.totalorder %s19, 1
    %p194 = por %p192, %p193
    %p196 = scmp.ne.s32.totalorder %s179, %s195
    %p197 = scmp.eq.s32.totalorder %s19, 0
    %p198 = por %p196, %p197
    %p199 = scmp.le.s32.totalorder 1, %s13
    %p200 = scmp.lt.s32.totalorder %s13, 3
    %p201 = pnand %p199, %p200
    %p202 = pneg %p201
    // Predicated region
    $region9: #{group_res_block.1} parent=5 // pred_check
      _
    $region10: #{group_res_block.1} parent=5 // pred_check_branch
      %204 = sbr.rel (%p201) target = $region12
    $region11: #{group_res_block.1} parent=5 // pred_region
      %s205 = ssub.s32 %s13, 1
      // Predicated region
      $region13: #{group_res_block.1} parent=11 // pred_check
        %p206 = pneg %p60
      $region14: #{group_res_block.1} parent=11 // pred_check_branch
        %208 = sbr.rel (%p206) target = $region16
      $region15: #{group_res_block.1} parent=11 // pred_region
        _
      $region16: #{group_res_block.1} parent=11 // pred_fallthru
        _
      // Predicated region
      $region17: #{group_res_block.1} parent=11 // pred_check
        %p209 = pneg %p81
      $region18: #{group_res_block.1} parent=11 // pred_check_branch
        %211 = sbr.rel (%p209) target = $region20
      $region19: #{group_res_block.1} parent=11 // pred_region
        _
      $region20: #{group_res_block.1} parent=11 // pred_fallthru
        _
      // Predicated region
      $region21: #{group_res_block.1} parent=11 // pred_check
        %p212 = pneg %p102
      $region22: #{group_res_block.1} parent=11 // pred_check_branch
        %214 = sbr.rel (%p212) target = $region24
      $region23: #{group_res_block.1} parent=11 // pred_region
        _
      $region24: #{group_res_block.1} parent=11 // pred_fallthru
        _
      // Predicated region
      $region25: #{group_res_block.1} parent=11 // pred_check
        %p215 = pneg %p123
      $region26: #{group_res_block.1} parent=11 // pred_check_branch
        %217 = sbr.rel (%p215) target = $region28
      $region27: #{group_res_block.1} parent=11 // pred_region
        _
      $region28: #{group_res_block.1} parent=11 // pred_fallthru
        _
      // Predicated region
      $region29: #{group_res_block.1} parent=11 // pred_check
        %p218 = pneg %p144
      $region30: #{group_res_block.1} parent=11 // pred_check_branch
        %220 = sbr.rel (%p218) target = $region32
      $region31: #{group_res_block.1} parent=11 // pred_region
        _
      $region32: #{group_res_block.1} parent=11 // pred_fallthru
        _
      // Predicated region
      $region33: #{group_res_block.1} parent=11 // pred_check
        %p221 = pneg %p165
      $region34: #{group_res_block.1} parent=11 // pred_check_branch
        %223 = sbr.rel (%p221) target = $region36
      $region35: #{group_res_block.1} parent=11 // pred_region
        _
      $region36: #{group_res_block.1} parent=11 // pred_fallthru
        _
    $region12: #{group_res_block.1} parent=5 // pred_fallthru
      _
    %p224 = scmp.lt.s32.totalorder %s13, 2
    // Predicated region
    $region37: #{group_res_block.1} parent=5 // pred_check
      %p225 = pneg %p224
    $region38: #{group_res_block.1} parent=5 // pred_check_branch
      %227 = sbr.rel (%p225) target = $region40
    $region39: #{group_res_block.1} parent=5 // pred_region
      // Predicated region
      $region41: #{group_res_block.1} parent=39 // pred_check
        %p228 = pneg %p33
      $region42: #{group_res_block.1} parent=39 // pred_check_branch
        %230 = sbr.rel (%p228) target = $region44
      $region43: #{group_res_block.1} parent=39 // pred_region
        %p231 = scmp.lt.s32.totalorder %s13, 1
        %s232 = scalar_select %p231, %s13, 1
        %s233 = smul.addr %s232, 2
        %s234 = smul.addr %s233, 8
        %s235 = scalar_lea.vmem %s0, %s234
      $region44: #{group_res_block.1} parent=39 // pred_fallthru
        _
    $region40: #{group_res_block.1} parent=5 // pred_fallthru
      _
    %p236 = scmp.le.s32.totalorder 1, %s13
    %p237 = scmp.lt.s32.totalorder %s13, 3
    %p238 = pnand %p236, %p237
    %p239 = pneg %p238
    // Predicated region
    $region45: #{group_res_block.1} parent=5 // pred_check
      _
    $region46: #{group_res_block.1} parent=5 // pred_check_branch
      %241 = sbr.rel (%p238) target = $region48
    $region47: #{group_res_block.1} parent=5 // pred_region
      %s242 = ssub.s32 %s13, 1
      %p243 = scmp.lt.s32.totalorder %s18, 1
      %s244 = scalar_select %p243, %s18, 1
      %s245 = smul.addr %s244, 2
      %s246 = smul.addr %s245, 8
      %s247 = scalar_lea.vmem %s0, %s246
      %p248 = pneg %p39
      %p249 = pneg %p36
      %p250 = pneg %p60
      %p251 = pneg %p57
      %p252 = pneg %p81
      %p253 = pneg %p78
      %p254 = pneg %p102
      %p255 = pneg %p99
      %p256 = pneg %p123
      %p257 = pneg %p120
      %p258 = pneg %p144
      %p259 = pneg %p141
      %p260 = pneg %p165
      %p261 = pneg %p162
      %p262 = pneg %p191
      %p263 = pneg %p188
      %p264 = scmp.lt.s32.totalorder %s18, 1
      %s265 = scalar_select %p264, %s18, 1
      %s266 = smul.addr %s265, 2
      %s267 = smul.addr %s266, 8
      %s268 = scalar_lea.vmem %s7, %s267
      %p269 = scmp.lt.s32.totalorder %s18, 1
      %s270 = scalar_select %p269, %s18, 1
      %s271 = smul.addr %s270, 2
      %s272 = smul.addr %s271, 8
      %s273 = scalar_lea.vmem %s0, %s272
      %p274 = scmp.lt.s32.totalorder %s18, 1
      %s275 = scalar_select %p274, %s18, 1
      %s276 = smul.addr %s275, 2
      %s277 = smul.addr %s276, 8
      %s278 = scalar_lea.vmem %s7, %s277
      %v279 = vld [vmem:[%s273] sm:$0xff]
      %v280 = vld [vmem:[%s273 + $0x8] sm:$0xff]
      %vm281 = vcmask 516096
      %282 = vst.msk [vmem:[#allocation2] sm:$0x1] %vm281, 0.0
      %283 = vst.msk [vmem:[#allocation2 + $0x11] sm:$0x1] %vm281, 0.0
      %vm284 = vcmask 523264
      %285 = vst.msk [vmem:[#allocation2 + $0x1] sm:$0xff] %vm284, %v279
      %286 = vst.msk [vmem:[#allocation2 + $0x9] sm:$0xff] %vm284, %v280
      %v287 = vld [vmem:[%s6] sm:$0x1]
      %v288 = vld [vmem:[#allocation2] sm:$0xff]
      %v289 = vld [vmem:[#allocation2 + $0x8] sm:$0xff]
      %v290 = vld [vmem:[%s5] sm:$0xff]
      %v291 = vld [vmem:[%s5 + $0x8] sm:$0xff]
      %v292 = vld [vmem:[%s5 + $0x10] sm:$0xff]
      %v293 = vld [vmem:[%s5 + $0x18] sm:$0xff]
      %v294 = vld [vmem:[%s5 + $0x20] sm:$0xff]
      %v295 = vld [vmem:[%s5 + $0x28] sm:$0xff]
      %v296 = vld [vmem:[%s5 + $0x30] sm:$0xff]
      %v297 = vld [vmem:[%s5 + $0x38] sm:$0xff]
      %v299 = vsel %vm284, %v288, 0
      %v302 = vsel %vm284, %v289, 0
      %304 = vmatprep.subr.mxu0 0.0
      %305 = vmatpush1.msra.mxu0 %v290
      %306 = vmatprep.subr.mxu0 0.0
      %307 = vmatpush1.msra.mxu0 %v291
      %308 = vmatprep.subr.mxu0 0.0
      %309 = vmatpush1.msra.mxu0 %v292
      %310 = vmatprep.subr.mxu0 0.0
      %311 = vmatpush1.msra.mxu0 %v293
      %312 = vmatprep.subr.mxu0 0.0
      %313 = vmatpush1.msra.mxu0 %v294
      %314 = vmatprep.subr.mxu0 0.0
      %315 = vmatpush1.msra.mxu0 %v295
      %316 = vmatprep.subr.mxu0 0.0
      %317 = vmatpush1.msra.mxu0 %v296
      %318 = vmatprep.subr.mxu0 0.0
      %319 = vmatpush1.msra.mxu0 %v297
      %320 = vmatprep.subr.mxu0 0.0
      %321 = vmatpush1.msra.mxu0 0.0
      %322 = vmatprep.subr.mxu0 0.0
      %323 = vmatpush1.msra.mxu0 0.0
      %324 = vmatprep.subr.mxu0 0.0
      %325 = vmatpush1.msra.mxu0 0.0
      %326 = vmatprep.subr.mxu0 0.0
      %327 = vmatpush1.msra.mxu0 0.0
      %328 = vmatprep.subr.mxu0 0.0
      %329 = vmatpush1.msra.mxu0 0.0
      %330 = vmatprep.subr.mxu0 0.0
      %331 = vmatpush1.msra.mxu0 0.0
      %332 = vmatprep.subr.mxu0 0.0
      %333 = vmatpush1.msra.mxu0 0.0
      %334 = vmatprep.subr.mxu0 0.0
      %335 = vmatpush1.msra.mxu0 0.0
      %336 = vmatprep.subr.mxu0 0.0
      %337 = vmatpush1.msra.mxu0 0.0
      %338 = vmatprep.subr.mxu0 0.0
      %339 = vmatpush1.msra.mxu0 0.0
      %340 = vmatprep.subr.mxu0 0.0
      %341 = vmatpush1.msra.mxu0 0.0
      %342 = vmatprep.subr.mxu0 0.0
      %343 = vmatpush1.msra.mxu0 0.0
      %344 = vmatprep.subr.mxu0 0.0
      %345 = vmatpush1.msra.mxu0 0.0
      %346 = vmatprep.subr.mxu0 0.0
      %347 = vmatpush1.msra.mxu0 0.0
      %348 = vmatprep.subr.mxu0 0.0
      %349 = vmatpush1.msra.mxu0 0.0
      %350 = vmatprep.subr.mxu0 0.0
      %351 = vmatpush1.msra.mxu0 0.0
      %352 = vmatprep.subr.mxu0 0.0
      %353 = vmatpush1.msra.mxu0 0.0
      %354 = vmatprep.subr.mxu0 0.0
      %355 = vmatpush1.msra.mxu0 0.0
      %356 = vmatprep.subr.mxu0 0.0
      %357 = vmatpush1.msra.mxu0 0.0
      %358 = vmatprep.subr.mxu0 0.0
      %359 = vmatpush1.msra.mxu0 0.0
      %360 = vmatprep.subr.mxu0 0.0
      %361 = vmatpush1.msra.mxu0 0.0
      %362 = vmatprep.subr.mxu0 0.0
      %363 = vmatpush1.msra.mxu0 0.0
      %364 = vmatprep.subr.mxu0 0.0
      %365 = vmatpush1.msra.mxu0 0.0
      %366 = vmatprep.subr.mxu0 0.0
      %367 = vmatpush1.msra.mxu0 0.0
      %368 = vmatprep.mubr.f32.mxu0 0.0
      %369 = vmatmul.mubr.f32.gmra.mrb[0].mxu0 %v299
      %v370 = vpop.f32.mrb[0].mxu0
      %v371 = vadd.f32 0.0, %v370
      %v372 = vpop.f32.mrb[0].mxu0
      %373 = vmatprep.mubr.f32.mxu0 0.0
      %374 = vmatmul.mubr.f32.gmra.mrb[0].mxu0 %v302
      %v375 = vpop.f32.mrb[0].mxu0
      %v376 = vadd.f32 0.0, %v375
      %v377 = vpop.f32.mrb[0].mxu0
      %378 = vdwg.mxu0
      %v380 = vlaneseq
      %v381 = vshrl.u32 %v380, 7
      %v382 = vsub.s32 0, %v381
      %v383 = vrot.slane %v287, %v382
      %v385 = vadd.f32 %v383, %v371
      %v386 = vadd.f32 %v383, %v376
      %v387 = vld [vmem:[#allocation2 + $0x1] sm:$0xff]
      %v388 = vld [vmem:[#allocation2 + $0x9] sm:$0xff]
      %s389 = scalar_lea.vmem %s5, 64
      %v390 = vld [vmem:[%s389] sm:$0xff]
      %v391 = vld [vmem:[%s389 + $0x8] sm:$0xff]
      %v392 = vld [vmem:[%s389 + $0x10] sm:$0xff]
      %v393 = vld [vmem:[%s389 + $0x18] sm:$0xff]
      %v394 = vld [vmem:[%s389 + $0x20] sm:$0xff]
      %v395 = vld [vmem:[%s389 + $0x28] sm:$0xff]
      %v396 = vld [vmem:[%s389 + $0x30] sm:$0xff]
      %v397 = vld [vmem:[%s389 + $0x38] sm:$0xff]
      %v399 = vsel %vm284, %v387, 0
      %v402 = vsel %vm284, %v388, 0
      %404 = vmatprep.subr.mxu0 0.0
      %405 = vmatpush1.msra.mxu0 %v390
      %406 = vmatprep.subr.mxu0 0.0
      %407 = vmatpush1.msra.mxu0 %v391
      %408 = vmatprep.subr.mxu0 0.0
      %409 = vmatpush1.msra.mxu0 %v392
      %410 = vmatprep.subr.mxu0 0.0
      %411 = vmatpush1.msra.mxu0 %v393
      %412 = vmatprep.subr.mxu0 0.0
      %413 = vmatpush1.msra.mxu0 %v394
      %414 = vmatprep.subr.mxu0 0.0
      %415 = vmatpush1.msra.mxu0 %v395
      %416 = vmatprep.subr.mxu0 0.0
      %417 = vmatpush1.msra.mxu0 %v396
      %418 = vmatprep.subr.mxu0 0.0
      %419 = vmatpush1.msra.mxu0 %v397
      %420 = vmatprep.subr.mxu0 0.0
      %421 = vmatpush1.msra.mxu0 0.0
      %422 = vmatprep.subr.mxu0 0.0
      %423 = vmatpush1.msra.mxu0 0.0
      %424 = vmatprep.subr.mxu0 0.0
      %425 = vmatpush1.msra.mxu0 0.0
      %426 = vmatprep.subr.mxu0 0.0
      %427 = vmatpush1.msra.mxu0 0.0
      %428 = vmatprep.subr.mxu0 0.0
      %429 = vmatpush1.msra.mxu0 0.0
      %430 = vmatprep.subr.mxu0 0.0
      %431 = vmatpush1.msra.mxu0 0.0
      %432 = vmatprep.subr.mxu0 0.0
      %433 = vmatpush1.msra.mxu0 0.0
      %434 = vmatprep.subr.mxu0 0.0
      %435 = vmatpush1.msra.mxu0 0.0
      %436 = vmatprep.subr.mxu0 0.0
      %437 = vmatpush1.msra.mxu0 0.0
      %438 = vmatprep.subr.mxu0 0.0
      %439 = vmatpush1.msra.mxu0 0.0
      %440 = vmatprep.subr.mxu0 0.0
      %441 = vmatpush1.msra.mxu0 0.0
      %442 = vmatprep.subr.mxu0 0.0
      %443 = vmatpush1.msra.mxu0 0.0
      %444 = vmatprep.subr.mxu0 0.0
      %445 = vmatpush1.msra.mxu0 0.0
      %446 = vmatprep.subr.mxu0 0.0
      %447 = vmatpush1.msra.mxu0 0.0
      %448 = vmatprep.subr.mxu0 0.0
      %449 = vmatpush1.msra.mxu0 0.0
      %450 = vmatprep.subr.mxu0 0.0
      %451 = vmatpush1.msra.mxu0 0.0
      %452 = vmatprep.subr.mxu0 0.0
      %453 = vmatpush1.msra.mxu0 0.0
      %454 = vmatprep.subr.mxu0 0.0
      %455 = vmatpush1.msra.mxu0 0.0
      %456 = vmatprep.subr.mxu0 0.0
      %457 = vmatpush1.msra.mxu0 0.0
      %458 = vmatprep.subr.mxu0 0.0
      %459 = vmatpush1.msra.mxu0 0.0
      %460 = vmatprep.subr.mxu0 0.0
      %461 = vmatpush1.msra.mxu0 0.0
      %462 = vmatprep.subr.mxu0 0.0
      %463 = vmatpush1.msra.mxu0 0.0
      %464 = vmatprep.subr.mxu0 0.0
      %465 = vmatpush1.msra.mxu0 0.0
      %466 = vmatprep.subr.mxu0 0.0
      %467 = vmatpush1.msra.mxu0 0.0
      %468 = vmatprep.mubr.f32.mxu0 0.0
      %469 = vmatmul.mubr.f32.gmra.mrb[0].mxu0 %v399
      %v470 = vpop.f32.mrb[0].mxu0
      %v471 = vadd.f32 0.0, %v470
      %v472 = vpop.f32.mrb[0].mxu0
      %473 = vmatprep.mubr.f32.mxu0 0.0
      %474 = vmatmul.mubr.f32.gmra.mrb[0].mxu0 %v402
      %v475 = vpop.f32.mrb[0].mxu0
      %v476 = vadd.f32 0.0, %v475
      %v477 = vpop.f32.mrb[0].mxu0
      %478 = vdwg.mxu0
      %v479 = vadd.f32 %v385, %v471
      %v480 = vadd.f32 %v386, %v476
      %v481 = vld [vmem:[#allocation2 + $0x2] sm:$0xff]
      %v482 = vld [vmem:[#allocation2 + $0xa] sm:$0xff]
      %s483 = scalar_lea.vmem %s5, 128
      %v484 = vld [vmem:[%s483] sm:$0xff]
      %v485 = vld [vmem:[%s483 + $0x8] sm:$0xff]
      %v486 = vld [vmem:[%s483 + $0x10] sm:$0xff]
      %v487 = vld [vmem:[%s483 + $0x18] sm:$0xff]
      %v488 = vld [vmem:[%s483 + $0x20] sm:$0xff]
      %v489 = vld [vmem:[%s483 + $0x28] sm:$0xff]
      %v490 = vld [vmem:[%s483 + $0x30] sm:$0xff]
      %v491 = vld [vmem:[%s483 + $0x38] sm:$0xff]
      %v493 = vsel %vm284, %v481, 0
      %v496 = vsel %vm284, %v482, 0
      %498 = vmatprep.subr.mxu0 0.0
      %499 = vmatpush1.msra.mxu0 %v484
      %500 = vmatprep.subr.mxu0 0.0
      %501 = vmatpush1.msra.mxu0 %v485
      %502 = vmatprep.subr.mxu0 0.0
      %503 = vmatpush1.msra.mxu0 %v486
      %504 = vmatprep.subr.mxu0 0.0
      %505 = vmatpush1.msra.mxu0 %v487
      %506 = vmatprep.subr.mxu0 0.0
      %507 = vmatpush1.msra.mxu0 %v488
      %508 = vmatprep.subr.mxu0 0.0
      %509 = vmatpush1.msra.mxu0 %v489
      %510 = vmatprep.subr.mxu0 0.0
      %511 = vmatpush1.msra.mxu0 %v490
      %512 = vmatprep.subr.mxu0 0.0
      %513 = vmatpush1.msra.mxu0 %v491
      %514 = vmatprep.subr.mxu0 0.0
      %515 = vmatpush1.msra.mxu0 0.0
      %516 = vmatprep.subr.mxu0 0.0
      %517 = vmatpush1.msra.mxu0 0.0
      %518 = vmatprep.subr.mxu0 0.0
      %519 = vmatpush1.msra.mxu0 0.0
      %520 = vmatprep.subr.mxu0 0.0
      %521 = vmatpush1.msra.mxu0 0.0
      %522 = vmatprep.subr.mxu0 0.0
      %523 = vmatpush1.msra.mxu0 0.0
      %524 = vmatprep.subr.mxu0 0.0
      %525 = vmatpush1.msra.mxu0 0.0
      %526 = vmatprep.subr.mxu0 0.0
      %527 = vmatpush1.msra.mxu0 0.0
      %528 = vmatprep.subr.mxu0 0.0
      %529 = vmatpush1.msra.mxu0 0.0
      %530 = vmatprep.subr.mxu0 0.0
      %531 = vmatpush1.msra.mxu0 0.0
      %532 = vmatprep.subr.mxu0 0.0
      %533 = vmatpush1.msra.mxu0 0.0
      %534 = vmatprep.subr.mxu0 0.0
      %535 = vmatpush1.msra.mxu0 0.0
      %536 = vmatprep.subr.mxu0 0.0
      %537 = vmatpush1.msra.mxu0 0.0
      %538 = vmatprep.subr.mxu0 0.0
      %539 = vmatpush1.msra.mxu0 0.0
      %540 = vmatprep.subr.mxu0 0.0
      %541 = vmatpush1.msra.mxu0 0.0
      %542 = vmatprep.subr.mxu0 0.0
      %543 = vmatpush1.msra.mxu0 0.0
      %544 = vmatprep.subr.mxu0 0.0
      %545 = vmatpush1.msra.mxu0 0.0
      %546 = vmatprep.subr.mxu0 0.0
      %547 = vmatpush1.msra.mxu0 0.0
      %548 = vmatprep.subr.mxu0 0.0
      %549 = vmatpush1.msra.mxu0 0.0
      %550 = vmatprep.subr.mxu0 0.0
      %551 = vmatpush1.msra.mxu0 0.0
      %552 = vmatprep.subr.mxu0 0.0
      %553 = vmatpush1.msra.mxu0 0.0
      %554 = vmatprep.subr.mxu0 0.0
      %555 = vmatpush1.msra.mxu0 0.0
      %556 = vmatprep.subr.mxu0 0.0
      %557 = vmatpush1.msra.mxu0 0.0
      %558 = vmatprep.subr.mxu0 0.0
      %559 = vmatpush1.msra.mxu0 0.0
      %560 = vmatprep.subr.mxu0 0.0
      %561 = vmatpush1.msra.mxu0 0.0
      %562 = vmatprep.mubr.f32.mxu0 0.0
      %563 = vmatmul.mubr.f32.gmra.mrb[0].mxu0 %v493
      %v564 = vpop.f32.mrb[0].mxu0
      %v565 = vadd.f32 0.0, %v564
      %v566 = vpop.f32.mrb[0].mxu0
      %567 = vmatprep.mubr.f32.mxu0 0.0
      %568 = vmatmul.mubr.f32.gmra.mrb[0].mxu0 %v496
      %v569 = vpop.f32.mrb[0].mxu0
      %v570 = vadd.f32 0.0, %v569
      %v571 = vpop.f32.mrb[0].mxu0
      %572 = vdwg.mxu0
      %v573 = vadd.f32 %v479, %v565
      %v574 = vadd.f32 %v480, %v570
      %v575 = vmax.f32 %v279, 0.0
      %v576 = vmax.f32 %v280, 0.0
      %577 = vst.msk [vmem:[#allocation2 + $0x1] sm:$0xff] %vm284, %v575
      %578 = vst.msk [vmem:[#allocation2 + $0x9] sm:$0xff] %vm284, %v576
      %v579 = vld [vmem:[%s2] sm:$0x1]
      %v580 = vld [vmem:[#allocation2] sm:$0xff]
      %v581 = vld [vmem:[#allocation2 + $0x8] sm:$0xff]
      %v582 = vld [vmem:[%s1] sm:$0xff]
      %v583 = vld [vmem:[%s1 + $0x8] sm:$0xff]
      %v584 = vld [vmem:[%s1 + $0x10] sm:$0xff]
      %v585 = vld [vmem:[%s1 + $0x18] sm:$0xff]
      %v586 = vld [vmem:[%s1 + $0x20] sm:$0xff]
      %v587 = vld [vmem:[%s1 + $0x28] sm:$0xff]
      %v588 = vld [vmem:[%s1 + $0x30] sm:$0xff]
      %v589 = vld [vmem:[%s1 + $0x38] sm:$0xff]
      %v591 = vsel %vm284, %v580, 0
      %v594 = vsel %vm284, %v581, 0
      %596 = vmatprep.subr.mxu0 0.0
      %597 = vmatpush1.msra.mxu0 %v582
      %598 = vmatprep.subr.mxu0 0.0
      %599 = vmatpush1.msra.mxu0 %v583
      %600 = vmatprep.subr.mxu0 0.0
      %601 = vmatpush1.msra.mxu0 %v584
      %602 = vmatprep.subr.mxu0 0.0
      %603 = vmatpush1.msra.mxu0 %v585
      %604 = vmatprep.subr.mxu0 0.0
      %605 = vmatpush1.msra.mxu0 %v586
      %606 = vmatprep.subr.mxu0 0.0
      %607 = vmatpush1.msra.mxu0 %v587
      %608 = vmatprep.subr.mxu0 0.0
      %609 = vmatpush1.msra.mxu0 %v588
      %610 = vmatprep.subr.mxu0 0.0
      %611 = vmatpush1.msra.mxu0 %v589
      %612 = vmatprep.subr.mxu0 0.0
      %613 = vmatpush1.msra.mxu0 0.0
      %614 = vmatprep.subr.mxu0 0.0
      %615 = vmatpush1.msra.mxu0 0.0
      %616 = vmatprep.subr.mxu0 0.0
      %617 = vmatpush1.msra.mxu0 0.0
      %618 = vmatprep.subr.mxu0 0.0
      %619 = vmatpush1.msra.mxu0 0.0
      %620 = vmatprep.subr.mxu0 0.0
      %621 = vmatpush1.msra.mxu0 0.0
      %622 = vmatprep.subr.mxu0 0.0
      %623 = vmatpush1.msra.mxu0 0.0
      %624 = vmatprep.subr.mxu0 0.0
      %625 = vmatpush1.msra.mxu0 0.0
      %626 = vmatprep.subr.mxu0 0.0
      %627 = vmatpush1.msra.mxu0 0.0
      %628 = vmatprep.subr.mxu0 0.0
      %629 = vmatpush1.msra.mxu0 0.0
      %630 = vmatprep.subr.mxu0 0.0
      %631 = vmatpush1.msra.mxu0 0.0
      %632 = vmatprep.subr.mxu0 0.0
      %633 = vmatpush1.msra.mxu0 0.0
      %634 = vmatprep.subr.mxu0 0.0
      %635 = vmatpush1.msra.mxu0 0.0
      %636 = vmatprep.subr.mxu0 0.0
      %637 = vmatpush1.msra.mxu0 0.0
      %638 = vmatprep.subr.mxu0 0.0
      %639 = vmatpush1.msra.mxu0 0.0
      %640 = vmatprep.subr.mxu0 0.0
      %641 = vmatpush1.msra.mxu0 0.0
      %642 = vmatprep.subr.mxu0 0.0
      %643 = vmatpush1.msra.mxu0 0.0
      %644 = vmatprep.subr.mxu0 0.0
      %645 = vmatpush1.msra.mxu0 0.0
      %646 = vmatprep.subr.mxu0 0.0
      %647 = vmatpush1.msra.mxu0 0.0
      %648 = vmatprep.subr.mxu0 0.0
      %649 = vmatpush1.msra.mxu0 0.0
      %650 = vmatprep.subr.mxu0 0.0
      %651 = vmatpush1.msra.mxu0 0.0
      %652 = vmatprep.subr.mxu0 0.0
      %653 = vmatpush1.msra.mxu0 0.0
      %654 = vmatprep.subr.mxu0 0.0
      %655 = vmatpush1.msra.mxu0 0.0
      %656 = vmatprep.subr.mxu0 0.0
      %657 = vmatpush1.msra.mxu0 0.0
      %658 = vmatprep.subr.mxu0 0.0
      %659 = vmatpush1.msra.mxu0 0.0
      %660 = vmatprep.mubr.f32.mxu0 0.0
      %661 = vmatmul.mubr.f32.gmra.mrb[0].mxu0 %v591
      %v662 = vpop.f32.mrb[0].mxu0
      %v663 = vadd.f32 0.0, %v662
      %v664 = vpop.f32.mrb[0].mxu0
      %665 = vmatprep.mubr.f32.mxu0 0.0
      %666 = vmatmul.mubr.f32.gmra.mrb[0].mxu0 %v594
      %v667 = vpop.f32.mrb[0].mxu0
      %v668 = vadd.f32 0.0, %v667
      %v669 = vpop.f32.mrb[0].mxu0
      %670 = vdwg.mxu0
      %v672 = vlaneseq
      %v673 = vshrl.u32 %v672, 7
      %v674 = vsub.s32 0, %v673
      %v675 = vrot.slane %v579, %v674
      %v677 = vadd.f32 %v675, %v663
      %v678 = vadd.f32 %v675, %v668
      %v679 = vld [vmem:[#allocation2 + $0x1] sm:$0xff]
      %v680 = vld [vmem:[#allocation2 + $0x9] sm:$0xff]
      %s681 = scalar_lea.vmem %s1, 64
      %v682 = vld [vmem:[%s681] sm:$0xff]
      %v683 = vld [vmem:[%s681 + $0x8] sm:$0xff]
      %v684 = vld [vmem:[%s681 + $0x10] sm:$0xff]
      %v685 = vld [vmem:[%s681 + $0x18] sm:$0xff]
      %v686 = vld [vmem:[%s681 + $0x20] sm:$0xff]
      %v687 = vld [vmem:[%s681 + $0x28] sm:$0xff]
      %v688 = vld [vmem:[%s681 + $0x30] sm:$0xff]
      %v689 = vld [vmem:[%s681 + $0x38] sm:$0xff]
      %v691 = vsel %vm284, %v679, 0
      %v694 = vsel %vm284, %v680, 0
      %696 = vmatprep.subr.mxu0 0.0
      %697 = vmatpush1.msra.mxu0 %v682
      %698 = vmatprep.subr.mxu0 0.0
      %699 = vmatpush1.msra.mxu0 %v683
      %700 = vmatprep.subr.mxu0 0.0
      %701 = vmatpush1.msra.mxu0 %v684
      %702 = vmatprep.subr.mxu0 0.0
      %703 = vmatpush1.msra.mxu0 %v685
      %704 = vmatprep.subr.mxu0 0.0
      %705 = vmatpush1.msra.mxu0 %v686
      %706 = vmatprep.subr.mxu0 0.0
      %707 = vmatpush1.msra.mxu0 %v687
      %708 = vmatprep.subr.mxu0 0.0
      %709 = vmatpush1.msra.mxu0 %v688
      %710 = vmatprep.subr.mxu0 0.0
      %711 = vmatpush1.msra.mxu0 %v689
      %712 = vmatprep.subr.mxu0 0.0
      %713 = vmatpush1.msra.mxu0 0.0
      %714 = vmatprep.subr.mxu0 0.0
      %715 = vmatpush1.msra.mxu0 0.0
      %716 = vmatprep.subr.mxu0 0.0
      %717 = vmatpush1.msra.mxu0 0.0
      %718 = vmatprep.subr.mxu0 0.0
      %719 = vmatpush1.msra.mxu0 0.0
      %720 = vmatprep.subr.mxu0 0.0
      %721 = vmatpush1.msra.mxu0 0.0
      %722 = vmatprep.subr.mxu0 0.0
      %723 = vmatpush1.msra.mxu0 0.0
      %724 = vmatprep.subr.mxu0 0.0
      %725 = vmatpush1.msra.mxu0 0.0
      %726 = vmatprep.subr.mxu0 0.0
      %727 = vmatpush1.msra.mxu0 0.0
      %728 = vmatprep.subr.mxu0 0.0
      %729 = vmatpush1.msra.mxu0 0.0
      %730 = vmatprep.subr.mxu0 0.0
      %731 = vmatpush1.msra.mxu0 0.0
      %732 = vmatprep.subr.mxu0 0.0
      %733 = vmatpush1.msra.mxu0 0.0
      %734 = vmatprep.subr.mxu0 0.0
      %735 = vmatpush1.msra.mxu0 0.0
      %736 = vmatprep.subr.mxu0 0.0
      %737 = vmatpush1.msra.mxu0 0.0
      %738 = vmatprep.subr.mxu0 0.0
      %739 = vmatpush1.msra.mxu0 0.0
      %740 = vmatprep.subr.mxu0 0.0
      %741 = vmatpush1.msra.mxu0 0.0
      %742 = vmatprep.subr.mxu0 0.0
      %743 = vmatpush1.msra.mxu0 0.0
      %744 = vmatprep.subr.mxu0 0.0
      %745 = vmatpush1.msra.mxu0 0.0
      %746 = vmatprep.subr.mxu0 0.0
      %747 = vmatpush1.msra.mxu0 0.0
      %748 = vmatprep.subr.mxu0 0.0
      %749 = vmatpush1.msra.mxu0 0.0
      %750 = vmatprep.subr.mxu0 0.0
      %751 = vmatpush1.msra.mxu0 0.0
      %752 = vmatprep.subr.mxu0 0.0
      %753 = vmatpush1.msra.mxu0 0.0
      %754 = vmatprep.subr.mxu0 0.0
      %755 = vmatpush1.msra.mxu0 0.0
      %756 = vmatprep.subr.mxu0 0.0
      %757 = vmatpush1.msra.mxu0 0.0
      %758 = vmatprep.subr.mxu0 0.0
      %759 = vmatpush1.msra.mxu0 0.0
      %760 = vmatprep.mubr.f32.mxu0 0.0
      %761 = vmatmul.mubr.f32.gmra.mrb[0].mxu0 %v691
      %v762 = vpop.f32.mrb[0].mxu0
      %v763 = vadd.f32 0.0, %v762
      %v764 = vpop.f32.mrb[0].mxu0
      %765 = vmatprep.mubr.f32.mxu0 0.0
      %766 = vmatmul.mubr.f32.gmra.mrb[0].mxu0 %v694
      %v767 = vpop.f32.mrb[0].mxu0
      %v768 = vadd.f32 0.0, %v767
      %v769 = vpop.f32.mrb[0].mxu0
      %770 = vdwg.mxu0
      %v771 = vadd.f32 %v677, %v763
      %v772 = vadd.f32 %v678, %v768
      %v773 = vld [vmem:[#allocation2 + $0x2] sm:$0xff]
      %v774 = vld [vmem:[#allocation2 + $0xa] sm:$0xff]
      %s775 = scalar_lea.vmem %s1, 128
      %v776 = vld [vmem:[%s775] sm:$0xff]
      %v777 = vld [vmem:[%s775 + $0x8] sm:$0xff]
      %v778 = vld [vmem:[%s775 + $0x10] sm:$0xff]
      %v779 = vld [vmem:[%s775 + $0x18] sm:$0xff]
      %v780 = vld [vmem:[%s775 + $0x20] sm:$0xff]
      %v781 = vld [vmem:[%s775 + $0x28] sm:$0xff]
      %v782 = vld [vmem:[%s775 + $0x30] sm:$0xff]
      %v783 = vld [vmem:[%s775 + $0x38] sm:$0xff]
      %v785 = vsel %vm284, %v773, 0
      %v788 = vsel %vm284, %v774, 0
      %790 = vmatprep.subr.mxu0 0.0
      %791 = vmatpush1.msra.mxu0 %v776
      %792 = vmatprep.subr.mxu0 0.0
      %793 = vmatpush1.msra.mxu0 %v777
      %794 = vmatprep.subr.mxu0 0.0
      %795 = vmatpush1.msra.mxu0 %v778
      %796 = vmatprep.subr.mxu0 0.0
      %797 = vmatpush1.msra.mxu0 %v779
      %798 = vmatprep.subr.mxu0 0.0
      %799 = vmatpush1.msra.mxu0 %v780
      %800 = vmatprep.subr.mxu0 0.0
      %801 = vmatpush1.msra.mxu0 %v781
      %802 = vmatprep.subr.mxu0 0.0
      %803 = vmatpush1.msra.mxu0 %v782
      %804 = vmatprep.subr.mxu0 0.0
      %805 = vmatpush1.msra.mxu0 %v783
      %806 = vmatprep.subr.mxu0 0.0
      %807 = vmatpush1.msra.mxu0 0.0
      %808 = vmatprep.subr.mxu0 0.0
      %809 = vmatpush1.msra.mxu0 0.0
      %810 = vmatprep.subr.mxu0 0.0
      %811 = vmatpush1.msra.mxu0 0.0
      %812 = vmatprep.subr.mxu0 0.0
      %813 = vmatpush1.msra.mxu0 0.0
      %814 = vmatprep.subr.mxu0 0.0
      %815 = vmatpush1.msra.mxu0 0.0
      %816 = vmatprep.subr.mxu0 0.0
      %817 = vmatpush1.msra.mxu0 0.0
      %818 = vmatprep.subr.mxu0 0.0
      %819 = vmatpush1.msra.mxu0 0.0
      %820 = vmatprep.subr.mxu0 0.0
      %821 = vmatpush1.msra.mxu0 0.0
      %822 = vmatprep.subr.mxu0 0.0
      %823 = vmatpush1.msra.mxu0 0.0
      %824 = vmatprep.subr.mxu0 0.0
      %825 = vmatpush1.msra.mxu0 0.0
      %826 = vmatprep.subr.mxu0 0.0
      %827 = vmatpush1.msra.mxu0 0.0
      %828 = vmatprep.subr.mxu0 0.0
      %829 = vmatpush1.msra.mxu0 0.0
      %830 = vmatprep.subr.mxu0 0.0
      %831 = vmatpush1.msra.mxu0 0.0
      %832 = vmatprep.subr.mxu0 0.0
      %833 = vmatpush1.msra.mxu0 0.0
      %834 = vmatprep.subr.mxu0 0.0
      %835 = vmatpush1.msra.mxu0 0.0
      %836 = vmatprep.subr.mxu0 0.0
      %837 = vmatpush1.msra.mxu0 0.0
      %838 = vmatprep.subr.mxu0 0.0
      %839 = vmatpush1.msra.mxu0 0.0
      %840 = vmatprep.subr.mxu0 0.0
      %841 = vmatpush1.msra.mxu0 0.0
      %842 = vmatprep.subr.mxu0 0.0
      %843 = vmatpush1.msra.mxu0 0.0
      %844 = vmatprep.subr.mxu0 0.0
      %845 = vmatpush1.msra.mxu0 0.0
      %846 = vmatprep.subr.mxu0 0.0
      %847 = vmatpush1.msra.mxu0 0.0
      %848 = vmatprep.subr.mxu0 0.0
      %849 = vmatpush1.msra.mxu0 0.0
      %850 = vmatprep.subr.mxu0 0.0
      %851 = vmatpush1.msra.mxu0 0.0
      %852 = vmatprep.subr.mxu0 0.0
      %853 = vmatpush1.msra.mxu0 0.0
      %854 = vmatprep.mubr.f32.mxu0 0.0
      %855 = vmatmul.mubr.f32.gmra.mrb[0].mxu0 %v785
      %v856 = vpop.f32.mrb[0].mxu0
      %v857 = vadd.f32 0.0, %v856
      %v858 = vpop.f32.mrb[0].mxu0
      %859 = vmatprep.mubr.f32.mxu0 0.0
      %860 = vmatmul.mubr.f32.gmra.mrb[0].mxu0 %v788
      %v861 = vpop.f32.mrb[0].mxu0
      %v862 = vadd.f32 0.0, %v861
      %v863 = vpop.f32.mrb[0].mxu0
      %864 = vdwg.mxu0
      %v865 = vadd.f32 %v771, %v857
      %v866 = vadd.f32 %v772, %v862
      %867 = vst [vmem:[#allocation3] sm:$0x1] 0.0
      %868 = vst [vmem:[#allocation3 + $0x11] sm:$0x1] 0.0
      %v869 = vmax.f32 %v865, 0.0
      %v870 = vmax.f32 %v866, 0.0
      %871 = vst [vmem:[#allocation3 + $0x1] sm:$0xff] %v869
      %872 = vst [vmem:[#allocation3 + $0x9] sm:$0xff] %v870
      %v873 = vld [vmem:[%s4] sm:$0x1]
      %v874 = vld [vmem:[#allocation3] sm:$0xff]
      %v875 = vld [vmem:[#allocation3 + $0x8] sm:$0xff]
      %v876 = vld [vmem:[%s3] sm:$0xff]
      %v877 = vld [vmem:[%s3 + $0x8] sm:$0xff]
      %v878 = vld [vmem:[%s3 + $0x10] sm:$0xff]
      %v879 = vld [vmem:[%s3 + $0x18] sm:$0xff]
      %v880 = vld [vmem:[%s3 + $0x20] sm:$0xff]
      %v881 = vld [vmem:[%s3 + $0x28] sm:$0xff]
      %v882 = vld [vmem:[%s3 + $0x30] sm:$0xff]
      %v883 = vld [vmem:[%s3 + $0x38] sm:$0xff]
      %v884 = vld [vmem:[%s3 + $0x40] sm:$0xff]
      %v885 = vld [vmem:[%s3 + $0x48] sm:$0xff]
      %v886 = vld [vmem:[%s3 + $0x50] sm:$0xff]
      %v887 = vld [vmem:[%s3 + $0x58] sm:$0xff]
      %v888 = vld [vmem:[%s3 + $0x60] sm:$0xff]
      %v889 = vld [vmem:[%s3 + $0x68] sm:$0xff]
      %v890 = vld [vmem:[%s3 + $0x70] sm:$0xff]
      %v891 = vld [vmem:[%s3 + $0x78] sm:$0xff]
      %892 = vmatprep.subr.mxu0 0.0
      %893 = vmatpush1.msra.mxu0 %v876
      %894 = vmatprep.subr.mxu0 0.0
      %895 = vmatpush1.msra.mxu0 %v877
      %896 = vmatprep.subr.mxu0 0.0
      %897 = vmatpush1.msra.mxu0 %v878
      %898 = vmatprep.subr.mxu0 0.0
      %899 = vmatpush1.msra.mxu0 %v879
      %900 = vmatprep.subr.mxu0 0.0
      %901 = vmatpush1.msra.mxu0 %v880
      %902 = vmatprep.subr.mxu0 0.0
      %903 = vmatpush1.msra.mxu0 %v881
      %904 = vmatprep.subr.mxu0 0.0
      %905 = vmatpush1.msra.mxu0 %v882
      %906 = vmatprep.subr.mxu0 0.0
      %907 = vmatpush1.msra.mxu0 %v883
      %908 = vmatprep.subr.mxu0 0.0
      %909 = vmatpush1.msra.mxu0 %v884
      %910 = vmatprep.subr.mxu0 0.0
      %911 = vmatpush1.msra.mxu0 %v885
      %912 = vmatprep.subr.mxu0 0.0
      %913 = vmatpush1.msra.mxu0 %v886
      %914 = vmatprep.subr.mxu0 0.0
      %915 = vmatpush1.msra.mxu0 %v887
      %916 = vmatprep.subr.mxu0 0.0
      %917 = vmatpush1.msra.mxu0 %v888
      %918 = vmatprep.subr.mxu0 0.0
      %919 = vmatpush1.msra.mxu0 %v889
      %920 = vmatprep.subr.mxu0 0.0
      %921 = vmatpush1.msra.mxu0 %v890
      %922 = vmatprep.subr.mxu0 0.0
      %923 = vmatpush1.msra.mxu0 %v891
      %924 = vmatprep.subr.mxu0 0.0
      %925 = vmatpush1.msra.mxu0 0.0
      %926 = vmatprep.subr.mxu0 0.0
      %927 = vmatpush1.msra.mxu0 0.0
      %928 = vmatprep.subr.mxu0 0.0
      %929 = vmatpush1.msra.mxu0 0.0
      %930 = vmatprep.subr.mxu0 0.0
      %931 = vmatpush1.msra.mxu0 0.0
      %932 = vmatprep.subr.mxu0 0.0
      %933 = vmatpush1.msra.mxu0 0.0
      %934 = vmatprep.subr.mxu0 0.0
      %935 = vmatpush1.msra.mxu0 0.0
      %936 = vmatprep.subr.mxu0 0.0
      %937 = vmatpush1.msra.mxu0 0.0
      %938 = vmatprep.subr.mxu0 0.0
      %939 = vmatpush1.msra.mxu0 0.0
      %940 = vmatprep.subr.mxu0 0.0
      %941 = vmatpush1.msra.mxu0 0.0
      %942 = vmatprep.subr.mxu0 0.0
      %943 = vmatpush1.msra.mxu0 0.0
      %944 = vmatprep.subr.mxu0 0.0
      %945 = vmatpush1.msra.mxu0 0.0
      %946 = vmatprep.subr.mxu0 0.0
      %947 = vmatpush1.msra.mxu0 0.0
      %948 = vmatprep.subr.mxu0 0.0
      %949 = vmatpush1.msra.mxu0 0.0
      %950 = vmatprep.subr.mxu0 0.0
      %951 = vmatpush1.msra.mxu0 0.0
      %952 = vmatprep.subr.mxu0 0.0
      %953 = vmatpush1.msra.mxu0 0.0
      %954 = vmatprep.subr.mxu0 0.0
      %955 = vmatpush1.msra.mxu0 0.0
      %956 = vmatprep.mubr.f32.mxu0 0.0
      %957 = vmatmul.mubr.f32.gmra.mrb[0].mxu0 %v874
      %v958 = vpop.f32.mrb[0].mxu0
      %v959 = vadd.f32 0.0, %v958
      %v960 = vpop.f32.mrb[0].mxu0
      %961 = vmatprep.mubr.f32.mxu0 0.0
      %962 = vmatmul.mubr.f32.gmra.mrb[0].mxu0 %v875
      %v963 = vpop.f32.mrb[0].mxu0
      %v964 = vadd.f32 0.0, %v963
      %v965 = vpop.f32.mrb[0].mxu0
      %966 = vdwg.mxu0
      %v968 = vlaneseq
      %v969 = vshrl.u32 %v968, 7
      %v970 = vsub.s32 0, %v969
      %v971 = vrot.slane %v873, %v970
      %v973 = vadd.f32 %v971, %v959
      %v974 = vadd.f32 %v971, %v964
      %v975 = vld [vmem:[#allocation3 + $0x1] sm:$0xff]
      %v976 = vld [vmem:[#allocation3 + $0x9] sm:$0xff]
      %s977 = scalar_lea.vmem %s3, 128
      %v978 = vld [vmem:[%s977] sm:$0xff]
      %v979 = vld [vmem:[%s977 + $0x8] sm:$0xff]
      %v980 = vld [vmem:[%s977 + $0x10] sm:$0xff]
      %v981 = vld [vmem:[%s977 + $0x18] sm:$0xff]
      %v982 = vld [vmem:[%s977 + $0x20] sm:$0xff]
      %v983 = vld [vmem:[%s977 + $0x28] sm:$0xff]
      %v984 = vld [vmem:[%s977 + $0x30] sm:$0xff]
      %v985 = vld [vmem:[%s977 + $0x38] sm:$0xff]
      %v986 = vld [vmem:[%s977 + $0x40] sm:$0xff]
      %v987 = vld [vmem:[%s977 + $0x48] sm:$0xff]
      %v988 = vld [vmem:[%s977 + $0x50] sm:$0xff]
      %v989 = vld [vmem:[%s977 + $0x58] sm:$0xff]
      %v990 = vld [vmem:[%s977 + $0x60] sm:$0xff]
      %v991 = vld [vmem:[%s977 + $0x68] sm:$0xff]
      %v992 = vld [vmem:[%s977 + $0x70] sm:$0xff]
      %v993 = vld [vmem:[%s977 + $0x78] sm:$0xff]
      %994 = vmatprep.subr.mxu0 0.0
      %995 = vmatpush1.msra.mxu0 %v978
      %996 = vmatprep.subr.mxu0 0.0
      %997 = vmatpush1.msra.mxu0 %v979
      %998 = vmatprep.subr.mxu0 0.0
      %999 = vmatpush1.msra.mxu0 %v980
      %1000 = vmatprep.subr.mxu0 0.0
      %1001 = vmatpush1.msra.mxu0 %v981
      %1002 = vmatprep.subr.mxu0 0.0
      %1003 = vmatpush1.msra.mxu0 %v982
      %1004 = vmatprep.subr.mxu0 0.0
      %1005 = vmatpush1.msra.mxu0 %v983
      %1006 = vmatprep.subr.mxu0 0.0
      %1007 = vmatpush1.msra.mxu0 %v984
      %1008 = vmatprep.subr.mxu0 0.0
      %1009 = vmatpush1.msra.mxu0 %v985
      %1010 = vmatprep.subr.mxu0 0.0
      %1011 = vmatpush1.msra.mxu0 %v986
      %1012 = vmatprep.subr.mxu0 0.0
      %1013 = vmatpush1.msra.mxu0 %v987
      %1014 = vmatprep.subr.mxu0 0.0
      %1015 = vmatpush1.msra.mxu0 %v988
      %1016 = vmatprep.subr.mxu0 0.0
      %1017 = vmatpush1.msra.mxu0 %v989
      %1018 = vmatprep.subr.mxu0 0.0
      %1019 = vmatpush1.msra.mxu0 %v990
      %1020 = vmatprep.subr.mxu0 0.0
      %1021 = vmatpush1.msra.mxu0 %v991
      %1022 = vmatprep.subr.mxu0 0.0
      %1023 = vmatpush1.msra.mxu0 %v992
      %1024 = vmatprep.subr.mxu0 0.0
      %1025 = vmatpush1.msra.mxu0 %v993
      %1026 = vmatprep.subr.mxu0 0.0
      %1027 = vmatpush1.msra.mxu0 0.0
      %1028 = vmatprep.subr.mxu0 0.0
      %1029 = vmatpush1.msra.mxu0 0.0
      %1030 = vmatprep.subr.mxu0 0.0
      %1031 = vmatpush1.msra.mxu0 0.0
      %1032 = vmatprep.subr.mxu0 0.0
      %1033 = vmatpush1.msra.mxu0 0.0
      %1034 = vmatprep.subr.mxu0 0.0
      %1035 = vmatpush1.msra.mxu0 0.0
      %1036 = vmatprep.subr.mxu0 0.0
      %1037 = vmatpush1.msra.mxu0 0.0
      %1038 = vmatprep.subr.mxu0 0.0
      %1039 = vmatpush1.msra.mxu0 0.0
      %1040 = vmatprep.subr.mxu0 0.0
      %1041 = vmatpush1.msra.mxu0 0.0
      %1042 = vmatprep.subr.mxu0 0.0
      %1043 = vmatpush1.msra.mxu0 0.0
      %1044 = vmatprep.subr.mxu0 0.0
      %1045 = vmatpush1.msra.mxu0 0.0
      %1046 = vmatprep.subr.mxu0 0.0
      %1047 = vmatpush1.msra.mxu0 0.0
      %1048 = vmatprep.subr.mxu0 0.0
      %1049 = vmatpush1.msra.mxu0 0.0
      %1050 = vmatprep.subr.mxu0 0.0
      %1051 = vmatpush1.msra.mxu0 0.0
      %1052 = vmatprep.subr.mxu0 0.0
      %1053 = vmatpush1.msra.mxu0 0.0
      %1054 = vmatprep.subr.mxu0 0.0
      %1055 = vmatpush1.msra.mxu0 0.0
      %1056 = vmatprep.subr.mxu0 0.0
      %1057 = vmatpush1.msra.mxu0 0.0
      %1058 = vmatprep.mubr.f32.mxu0 0.0
      %1059 = vmatmul.mubr.f32.gmra.mrb[0].mxu0 %v975
      %v1060 = vpop.f32.mrb[0].mxu0
      %v1061 = vadd.f32 0.0, %v1060
      %v1062 = vpop.f32.mrb[0].mxu0
      %1063 = vmatprep.mubr.f32.mxu0 0.0
      %1064 = vmatmul.mubr.f32.gmra.mrb[0].mxu0 %v976
      %v1065 = vpop.f32.mrb[0].mxu0
      %v1066 = vadd.f32 0.0, %v1065
      %v1067 = vpop.f32.mrb[0].mxu0
      %1068 = vdwg.mxu0
      %v1069 = vadd.f32 %v973, %v1061
      %v1070 = vadd.f32 %v974, %v1066
      %v1071 = vld [vmem:[#allocation3 + $0x2] sm:$0xff]
      %v1072 = vld [vmem:[#allocation3 + $0xa] sm:$0xff]
      %s1073 = scalar_lea.vmem %s3, 256
      %v1074 = vld [vmem:[%s1073] sm:$0xff]
      %v1075 = vld [vmem:[%s1073 + $0x8] sm:$0xff]
      %v1076 = vld [vmem:[%s1073 + $0x10] sm:$0xff]
      %v1077 = vld [vmem:[%s1073 + $0x18] sm:$0xff]
      %v1078 = vld [vmem:[%s1073 + $0x20] sm:$0xff]
      %v1079 = vld [vmem:[%s1073 + $0x28] sm:$0xff]
      %v1080 = vld [vmem:[%s1073 + $0x30] sm:$0xff]
      %v1081 = vld [vmem:[%s1073 + $0x38] sm:$0xff]
      %v1082 = vld [vmem:[%s1073 + $0x40] sm:$0xff]
      %v1083 = vld [vmem:[%s1073 + $0x48] sm:$0xff]
      %v1084 = vld [vmem:[%s1073 + $0x50] sm:$0xff]
      %v1085 = vld [vmem:[%s1073 + $0x58] sm:$0xff]
      %v1086 = vld [vmem:[%s1073 + $0x60] sm:$0xff]
      %v1087 = vld [vmem:[%s1073 + $0x68] sm:$0xff]
      %v1088 = vld [vmem:[%s1073 + $0x70] sm:$0xff]
      %v1089 = vld [vmem:[%s1073 + $0x78] sm:$0xff]
      %1090 = vmatprep.subr.mxu0 0.0
      %1091 = vmatpush1.msra.mxu0 %v1074
      %1092 = vmatprep.subr.mxu0 0.0
      %1093 = vmatpush1.msra.mxu0 %v1075
      %1094 = vmatprep.subr.mxu0 0.0
      %1095 = vmatpush1.msra.mxu0 %v1076
      %1096 = vmatprep.subr.mxu0 0.0
      %1097 = vmatpush1.msra.mxu0 %v1077
      %1098 = vmatprep.subr.mxu0 0.0
      %1099 = vmatpush1.msra.mxu0 %v1078
      %1100 = vmatprep.subr.mxu0 0.0
      %1101 = vmatpush1.msra.mxu0 %v1079
      %1102 = vmatprep.subr.mxu0 0.0
      %1103 = vmatpush1.msra.mxu0 %v1080
      %1104 = vmatprep.subr.mxu0 0.0
      %1105 = vmatpush1.msra.mxu0 %v1081
      %1106 = vmatprep.subr.mxu0 0.0
      %1107 = vmatpush1.msra.mxu0 %v1082
      %1108 = vmatprep.subr.mxu0 0.0
      %1109 = vmatpush1.msra.mxu0 %v1083
      %1110 = vmatprep.subr.mxu0 0.0
      %1111 = vmatpush1.msra.mxu0 %v1084
      %1112 = vmatprep.subr.mxu0 0.0
      %1113 = vmatpush1.msra.mxu0 %v1085
      %1114 = vmatprep.subr.mxu0 0.0
      %1115 = vmatpush1.msra.mxu0 %v1086
      %1116 = vmatprep.subr.mxu0 0.0
      %1117 = vmatpush1.msra.mxu0 %v1087
      %1118 = vmatprep.subr.mxu0 0.0
      %1119 = vmatpush1.msra.mxu0 %v1088
      %1120 = vmatprep.subr.mxu0 0.0
      %1121 = vmatpush1.msra.mxu0 %v1089
      %1122 = vmatprep.subr.mxu0 0.0
      %1123 = vmatpush1.msra.mxu0 0.0
      %1124 = vmatprep.subr.mxu0 0.0
      %1125 = vmatpush1.msra.mxu0 0.0
      %1126 = vmatprep.subr.mxu0 0.0
      %1127 = vmatpush1.msra.mxu0 0.0
      %1128 = vmatprep.subr.mxu0 0.0
      %1129 = vmatpush1.msra.mxu0 0.0
      %1130 = vmatprep.subr.mxu0 0.0
      %1131 = vmatpush1.msra.mxu0 0.0
      %1132 = vmatprep.subr.mxu0 0.0
      %1133 = vmatpush1.msra.mxu0 0.0
      %1134 = vmatprep.subr.mxu0 0.0
      %1135 = vmatpush1.msra.mxu0 0.0
      %1136 = vmatprep.subr.mxu0 0.0
      %1137 = vmatpush1.msra.mxu0 0.0
      %1138 = vmatprep.subr.mxu0 0.0
      %1139 = vmatpush1.msra.mxu0 0.0
      %1140 = vmatprep.subr.mxu0 0.0
      %1141 = vmatpush1.msra.mxu0 0.0
      %1142 = vmatprep.subr.mxu0 0.0
      %1143 = vmatpush1.msra.mxu0 0.0
      %1144 = vmatprep.subr.mxu0 0.0
      %1145 = vmatpush1.msra.mxu0 0.0
      %1146 = vmatprep.subr.mxu0 0.0
      %1147 = vmatpush1.msra.mxu0 0.0
      %1148 = vmatprep.subr.mxu0 0.0
      %1149 = vmatpush1.msra.mxu0 0.0
      %1150 = vmatprep.subr.mxu0 0.0
      %1151 = vmatpush1.msra.mxu0 0.0
      %1152 = vmatprep.subr.mxu0 0.0
      %1153 = vmatpush1.msra.mxu0 0.0
      %1154 = vmatprep.mubr.f32.mxu0 0.0
      %1155 = vmatmul.mubr.f32.gmra.mrb[0].mxu0 %v1071
      %v1156 = vpop.f32.mrb[0].mxu0
      %v1157 = vadd.f32 0.0, %v1156
      %v1158 = vpop.f32.mrb[0].mxu0
      %1159 = vmatprep.mubr.f32.mxu0 0.0
      %1160 = vmatmul.mubr.f32.gmra.mrb[0].mxu0 %v1072
      %v1161 = vpop.f32.mrb[0].mxu0
      %v1162 = vadd.f32 0.0, %v1161
      %v1163 = vpop.f32.mrb[0].mxu0
      %1164 = vdwg.mxu0
      %v1165 = vadd.f32 %v1069, %v1157
      %v1166 = vadd.f32 %v1070, %v1162
      %v1167 = vadd.f32 %v1165, %v573
      %v1168 = vadd.f32 %v1166, %v574
      %1169 = vst [vmem:[%s278] sm:$0xff] %v1167
      %1170 = vst [vmem:[%s278 + $0x8] sm:$0xff] %v1168
      %p1171 = scmp.lt.s32.totalorder %s18, 1
      %s1172 = scalar_select %p1171, %s18, 1
      %s1173 = smul.addr %s1172, 2
      %s1174 = smul.addr %s1173, 8
      %s1175 = scalar_lea.vmem %s7, %s1174
      // Predicated region
      $region49: #{group_res_block.1} parent=47 // pred_check
        %p1176 = pneg %p188
      $region50: #{group_res_block.1} parent=47 // pred_check_branch
        %1178 = sbr.rel (%p1176) target = $region52
      $region51: #{group_res_block.1} parent=47 // pred_region
        _
      $region52: #{group_res_block.1} parent=47 // pred_fallthru
        _
    $region48: #{group_res_block.1} parent=5 // pred_fallthru
      _
    %p1179 = scmp.le.s32.totalorder 2, %s13
    // Predicated region
    $region53: #{group_res_block.1} parent=5 // pred_check
      %p1180 = pneg %p1179
    $region54: #{group_res_block.1} parent=5 // pred_check_branch
      %1182 = sbr.rel (%p1180) target = $region56
    $region55: #{group_res_block.1} parent=5 // pred_region
      %s1183 = ssub.s32 %s13, 2
      // Predicated region
      $region57: #{group_res_block.1} parent=55 // pred_check
        %p1184 = pneg %p194
      $region58: #{group_res_block.1} parent=55 // pred_check_branch
        %1186 = sbr.rel (%p1184) target = $region60
      $region59: #{group_res_block.1} parent=55 // pred_region
        %p1187 = scmp.lt.s32.totalorder %s19, 1
        %s1188 = scalar_select %p1187, %s19, 1
        %s1189 = smul.addr %s1188, 2
        %s1190 = smul.addr %s1189, 8
        %s1191 = scalar_lea.vmem %s7, %s1190
      $region60: #{group_res_block.1} parent=55 // pred_fallthru
        _
    $region56: #{group_res_block.1} parent=5 // pred_fallthru
      _
  $region6: #{group_res_block.1} parent=0 // loop_footer
    %s17 = sadd.s32 1, %s13
  $region7: #{group_res_block.1} parent=0 // loop_footer_branch
    %12 = sbr.rel target = $region3
  $region8: #{group_res_block.1} parent=0 // loop_exit
    _

</llo_original>
